<compile_context>
chip_gen: v7x
topology: tpu7x:2x2x1
jax: 0.10.0
libtpu: 0.0.40
codegen_flags: <defaults>
</compile_context>

<pallas_src>
import jax
import jax.numpy as jnp
import numpy as np
from jax import lax
from jax.experimental import pallas as pl
from jax.experimental.pallas import tpu as pltpu

BN_EPS = 1e-5
ALPHA = 0.5          # Cons_GraphConv.alpha
PAD = 128            # lane-dense feature padding


# --------------------------------- kernel -----------------------------------
def _gnn_kernel(x_ref, adj_ref, wpack_ref, vpack_ref, out_ref):
    # x_ref:    (B*N, P)  zero-padded node features (flattened in the wrapper)
    # adj_ref:  (B, N, N) dense adjacency
    # wpack_ref:(6P, P)   rows [0:P]=W1, [P:2P]=W2, [2P:3P]=W3, [3P:6P]=W_lin
    # vpack_ref:(10, P)   rows 0..2=b1..b3, 3..5=g1..g3, 6..8=be1..be3, 9=lin bias
    P = x_ref.shape[-1]
    x = x_ref[...]
    adj = adj_ref[...]
    B, N, _ = adj.shape
    BN = B * N

    vp = vpack_ref[...]                                   # (10, P), ~2 vregs
    b1, b2, b3 = vp[0:1], vp[1:2], vp[2:3]
    g1, g2, g3 = vp[3:4], vp[4:5], vp[5:6]
    be1, be2, be3 = vp[6:7], vp[7:8], vp[8:9]
    lb = vp[9:10]

    # ---- adjacency normalization: computed once, reused by all 3 layers ----
    # c_adj = alpha*((alpha+1)*I + D^-1/2 A D^-1/2); alpha is folded into the
    # degree normalization (dis = rsqrt(deg/alpha)), the identity part is a
    # scalar scale on x@W, so only one normalized (B,N,N) is materialized.
    deg = jnp.maximum(jnp.sum(adj, axis=-1), 1.0)                 # (B, N)
    dis = lax.rsqrt(deg * (1.0 / ALPHA))                          # EUP rsqrt
    adj_a = dis[:, :, None] * adj * dis[:, None, :]               # (B, N, N)
    diag = ALPHA * (ALPHA + 1.0)

    def conv(h, w, bias):
        # h: (B*N, P), w: (P, P), bias: (1, P)
        xw = jnp.dot(h, w, preferred_element_type=jnp.float32)
        prop = jnp.einsum("bnm,bmc->bnc", adj_a, xw.reshape(B, N, P),
                          preferred_element_type=jnp.float32).reshape(BN, P)
        return diag * xw + prop + bias

    def relu_bn(h, gamma, beta):
        # relu, then training-mode BatchNorm1d folded to a per-feature affine:
        #   scale = gamma * rsqrt(var + eps),  shift = beta - mean * scale
        # with single-pass (sum, sum-of-squares) statistics over the B*N rows.
        # Pad columns (h == 0, gamma == 0) stay exactly zero.
        h = jnp.maximum(h, 0.0)
        inv_n = 1.0 / h.shape[0]
        mean = jnp.sum(h, axis=0, keepdims=True) * inv_n
        ex2 = jnp.sum(h * h, axis=0, keepdims=True) * inv_n
        var = ex2 - mean * mean                                   # biased var
        scale = gamma * lax.rsqrt(var + BN_EPS)
        shift = beta - mean * scale
        return h * scale + shift

    # static ref slices of the packed weight slab (zero-cost views)
    x1 = relu_bn(conv(x,  wpack_ref[0 * P:1 * P, :], b1), g1, be1)
    x2 = relu_bn(conv(x1, wpack_ref[1 * P:2 * P, :], b2), g2, be2)
    x3 = relu_bn(conv(x2, wpack_ref[2 * P:3 * P, :], b3), g3, be3)

    # relu(lin(cat([x1,x2,x3], -1))) as ONE matmul against the packed linear
    # weight; the concat is lane-aligned at 128-column boundaries (cheap).
    x_cat = jnp.concatenate([x1, x2, x3], axis=-1)                # (B*N, 3P)
    y = jnp.dot(x_cat, wpack_ref[3 * P:6 * P, :],
                preferred_element_type=jnp.float32) + lb
    out_ref[...] = jnp.maximum(y, 0.0)          # lane-dense (B*N, P) store


# -------------------------------- wrapper ------------------------------------
def gnn_forward(x, adj, params):
    B, N, f_in = x.shape
    hidden_c = params["w1"].shape[-1]
    out_c = params["w3"].shape[-1]
    P = PAD
    assert f_in <= P and hidden_c <= P and out_c <= P

    def pad2(a, rows, cols):
        return jnp.pad(a, ((0, rows - a.shape[0]), (0, cols - a.shape[1])))

    # ---- pack the 4 weight matrices into one lane-dense (6P, P) slab --------
    w1p = pad2(params["w1"], P, P)
    w2p = pad2(params["w2"], P, P)
    w3p = pad2(params["w3"], P, P)
    lwp = jnp.zeros((3 * P, P), jnp.float32)
    lwp = lwp.at[0:hidden_c, 0:out_c].set(params["lw1"])
    lwp = lwp.at[P:P + hidden_c, 0:out_c].set(params["lw2"])
    lwp = lwp.at[2 * P:2 * P + out_c, 0:out_c].set(params["lw3"])
    wpack = jnp.concatenate([w1p, w2p, w3p, lwp], axis=0)         # (6P, P)

    # ---- pack the 10 per-feature vectors into one (10, P) slab --------------
    def vrow(v):
        return jnp.pad(v[0], (0, P - v.shape[1]))                 # zero pad

    vpack = jnp.stack([vrow(params[k]) for k in
                       ("b1", "b2", "b3", "g1", "g2", "g3",
                        "be1", "be2", "be3", "lb")], axis=0)      # (10, P)

    xp = jnp.pad(x.reshape(B * N, f_in), ((0, 0), (0, P - f_in)))  # (B*N, P)

    args = (xp, adj, wpack, vpack)
    vspec = pl.BlockSpec(memory_space=pltpu.MemorySpace.VMEM)
    out2d = pl.pallas_call(
        _gnn_kernel,
        out_shape=jax.ShapeDtypeStruct((B * N, P), jnp.float32),
        in_specs=[vspec] * len(args),
        out_specs=vspec,
        # explicit scoped-VMEM budget (<= physical on v5e/v6e/v7x); toy shapes
        # fit easily, but this keeps the whole-array-resident strategy safe.
        compiler_params=pltpu.CompilerParams(vmem_limit_bytes=32 * 1024 * 1024),
    )(*args)
    return out2d[:, :out_c].reshape(B, N, out_c)


# ------------------------ deterministic param init ---------------------------
def init_params(key, in_c, hidden_c, out_c):
    ks = jax.random.split(key, 4)

    def xavier(k, fi, fo):  # xavier_normal_
        std = (2.0 / (fi + fo)) ** 0.5
        return std * jax.random.normal(k, (fi, fo), jnp.float32)

    p = {
        "w1": xavier(ks[0], in_c, hidden_c), "b1": jnp.zeros((1, hidden_c), jnp.float32),
        "w2": xavier(ks[1], hidden_c, hidden_c), "b2": jnp.zeros((1, hidden_c), jnp.float32),
        "w3": xavier(ks[2], hidden_c, out_c), "b3": jnp.zeros((1, out_c), jnp.float32),
        "g1": jnp.ones((1, hidden_c), jnp.float32), "be1": jnp.zeros((1, hidden_c), jnp.float32),
        "g2": jnp.ones((1, hidden_c), jnp.float32), "be2": jnp.zeros((1, hidden_c), jnp.float32),
        "g3": jnp.ones((1, out_c), jnp.float32), "be3": jnp.zeros((1, out_c), jnp.float32),
    }
    lin_in = 2 * hidden_c + out_c
    lw = xavier(ks[3], lin_in, out_c)            # stored (in, out) = lin.weight.T
    p["lw1"] = lw[:hidden_c]
    p["lw2"] = lw[hidden_c:2 * hidden_c]
    p["lw3"] = lw[2 * hidden_c:]
    p["lb"] = jnp.zeros((1, out_c), jnp.float32)
    return p


# ---------------------------- pure-JAX reference ------------------------------
def _gnn_reference(x, adj, p):
    def cgc(x_, w, b):
        out = jnp.einsum("bnf,fc->bnc", x_, w)
        deg = jnp.maximum(adj.sum(-1), 1.0)
        dis = deg ** -0.5
        adj_n = dis[:, :, None] * adj * dis[:, None, :]
        eye = jnp.eye(adj.shape[1])[None]
        c_adj = ALPHA * ((ALPHA + 1.0) * eye + adj_n)
        return jnp.einsum("bnm,bmc->bnc", c_adj, out) + b[0]

    def bn(x_, g, be):
        m = x_.mean(axis=(0, 1), keepdims=True)
        v = ((x_ - m) ** 2).mean(axis=(0, 1), keepdims=True)
        return (x_ - m) / jnp.sqrt(v + BN_EPS) * g[0] + be[0]

    x1 = bn(jax.nn.relu(cgc(x, p["w1"], p["b1"])), p["g1"], p["be1"])
    x2 = bn(jax.nn.relu(cgc(x1, p["w2"], p["b2"])), p["g2"], p["be2"])
    x3 = bn(jax.nn.relu(cgc(x2, p["w3"], p["b3"])), p["g3"], p["be3"])
    cat = jnp.concatenate([x1, x2, x3], axis=-1)
    lw = jnp.concatenate([p["lw1"], p["lw2"], p["lw3"]], axis=0)
    return jax.nn.relu(cat @ lw + p["lb"][0])


# ----------------------------------- main -------------------------------------
if __name__ == "__main__":
    B, N = 2, 16
    in_c, hidden_c, out_c = 8, 32, 16

    key = jax.random.PRNGKey(0)
    kx, kadj, kp = jax.random.split(key, 3)

    x = jax.random.normal(kx, (B, N, in_c), jnp.float32)
    a = (jax.random.uniform(kadj, (B, N, N)) > 0.5).astype(jnp.float32)
    adj = jnp.maximum(a, jnp.swapaxes(a, -1, -2))            # symmetric 0/1 adjacency

    params = init_params(kp, in_c, hidden_c, out_c)

    out = gnn_forward(x, adj, params)
    out = jax.block_until_ready(out)

    ref = _gnn_reference(x, adj, params)
    np.testing.assert_allclose(np.asarray(out), np.asarray(ref), rtol=1e-4, atol=1e-4)

    print("KERNEL_OK")
</pallas_src>

<mosaic_0001>
module attributes {stable_mosaic.version = 11 : i64} {
  func.func @_gnn_kernel(%arg0: memref<32x128xf32, #tpu.memory_space<vmem>>, %arg1: memref<2x16x16xf32, #tpu.memory_space<vmem>>, %arg2: memref<768x128xf32, #tpu.memory_space<vmem>>, %arg3: memref<10x128xf32, #tpu.memory_space<vmem>>, %arg4: memref<32x128xf32, #tpu.memory_space<vmem>>) attributes {dimension_semantics = [], scalar_prefetch = 0 : i64, scratch_operands = 0 : i64, tpu.core_type = #tpu.core_type<tc>} {
    %c0 = arith.constant 0 : index
    %c0_0 = arith.constant 0 : index
    %0 = vector.load %arg0[%c0, %c0_0] : memref<32x128xf32, #tpu.memory_space<vmem>>, vector<32x128xf32>
    %c0_1 = arith.constant 0 : index
    %c0_2 = arith.constant 0 : index
    %c0_3 = arith.constant 0 : index
    %1 = vector.load %arg1[%c0_1, %c0_2, %c0_3] : memref<2x16x16xf32, #tpu.memory_space<vmem>>, vector<2x16x16xf32>
    %c0_4 = arith.constant 0 : index
    %c0_5 = arith.constant 0 : index
    %2 = vector.load %arg3[%c0_4, %c0_5] : memref<10x128xf32, #tpu.memory_space<vmem>>, vector<10x128xf32>
    %3 = vector.extract_strided_slice %2 {offsets = [0, 0], sizes = [1, 128], strides = [1, 1]} : vector<10x128xf32> to vector<1x128xf32>
    %4 = vector.extract_strided_slice %2 {offsets = [1, 0], sizes = [1, 128], strides = [1, 1]} : vector<10x128xf32> to vector<1x128xf32>
    %5 = vector.extract_strided_slice %2 {offsets = [2, 0], sizes = [1, 128], strides = [1, 1]} : vector<10x128xf32> to vector<1x128xf32>
    %6 = vector.extract_strided_slice %2 {offsets = [3, 0], sizes = [1, 128], strides = [1, 1]} : vector<10x128xf32> to vector<1x128xf32>
    %7 = vector.extract_strided_slice %2 {offsets = [4, 0], sizes = [1, 128], strides = [1, 1]} : vector<10x128xf32> to vector<1x128xf32>
    %8 = vector.extract_strided_slice %2 {offsets = [5, 0], sizes = [1, 128], strides = [1, 1]} : vector<10x128xf32> to vector<1x128xf32>
    %9 = vector.extract_strided_slice %2 {offsets = [6, 0], sizes = [1, 128], strides = [1, 1]} : vector<10x128xf32> to vector<1x128xf32>
    %10 = vector.extract_strided_slice %2 {offsets = [7, 0], sizes = [1, 128], strides = [1, 1]} : vector<10x128xf32> to vector<1x128xf32>
    %11 = vector.extract_strided_slice %2 {offsets = [8, 0], sizes = [1, 128], strides = [1, 1]} : vector<10x128xf32> to vector<1x128xf32>
    %12 = vector.extract_strided_slice %2 {offsets = [9, 0], sizes = [1, 128], strides = [1, 1]} : vector<10x128xf32> to vector<1x128xf32>
    %cst = arith.constant dense<0.000000e+00> : vector<2x16xf32>
    %13 = vector.multi_reduction <add>, %1, %cst [2] : vector<2x16x16xf32> to vector<2x16xf32>
    %cst_6 = arith.constant 1.000000e+00 : f32
    %14 = vector.broadcast %cst_6 : f32 to vector<2x16xf32>
    %15 = arith.maximumf %13, %14 : vector<2x16xf32>
    %cst_7 = arith.constant 2.000000e+00 : f32
    %16 = vector.broadcast %cst_7 : f32 to vector<2x16xf32>
    %17 = arith.mulf %15, %16 : vector<2x16xf32>
    %18 = math.rsqrt %17 : vector<2x16xf32>
    %19 = vector.shape_cast %18 : vector<2x16xf32> to vector<2x16x1xf32>
    %20 = vector.broadcast %19 : vector<2x16x1xf32> to vector<2x16x16xf32>
    %21 = arith.mulf %20, %1 : vector<2x16x16xf32>
    %22 = vector.shape_cast %18 : vector<2x16xf32> to vector<2x1x16xf32>
    %23 = vector.broadcast %22 : vector<2x1x16xf32> to vector<2x16x16xf32>
    %24 = arith.mulf %21, %23 : vector<2x16x16xf32>
    %c0_8 = arith.constant 0 : index
    %c0_9 = arith.constant 0 : index
    %25 = vector.load %arg2[%c0_8, %c0_9] : memref<768x128xf32, #tpu.memory_space<vmem>>, vector<128x128xf32>
    %cst_10 = arith.constant dense<0.000000e+00> : vector<32x128xf32>
    %26 = tpu.matmul %0, %25, %cst_10 {dimension_numbers = #tpu.dot_dimension_numbers<[1], [0], [0], [1], [0, 0, 1, 1], [], []>} : vector<32x128xf32>, vector<128x128xf32>, vector<32x128xf32> -> vector<32x128xf32>
    %27 = vector.shape_cast %26 : vector<32x128xf32> to vector<2x16x128xf32>
    "tpu.trace_start"() <{level = 10 : i32, message = "bnm,bmc->bnc"}> : () -> ()
    %cst_11 = arith.constant dense<0.000000e+00> : vector<2x16x128xf32>
    %28 = tpu.matmul %24, %27, %cst_11 {dimension_numbers = #tpu.dot_dimension_numbers<[2], [1], [1], [2], [0, 0, 0, 1, 1, 2], [0], [0]>} : vector<2x16x16xf32>, vector<2x16x128xf32>, vector<2x16x128xf32> -> vector<2x16x128xf32>
    "tpu.trace_stop"() : () -> ()
    %29 = vector.shape_cast %28 : vector<2x16x128xf32> to vector<32x128xf32>
    %cst_12 = arith.constant 7.500000e-01 : f32
    %30 = vector.broadcast %cst_12 : f32 to vector<32x128xf32>
    %31 = arith.mulf %30, %26 : vector<32x128xf32>
    %32 = arith.addf %31, %29 : vector<32x128xf32>
    %33 = vector.broadcast %3 : vector<1x128xf32> to vector<32x128xf32>
    %34 = arith.addf %32, %33 : vector<32x128xf32>
    %cst_13 = arith.constant 0.000000e+00 : f32
    %35 = vector.broadcast %cst_13 : f32 to vector<32x128xf32>
    %36 = arith.maximumf %34, %35 : vector<32x128xf32>
    %cst_14 = arith.constant dense<0.000000e+00> : vector<128xf32>
    %37 = vector.multi_reduction <add>, %36, %cst_14 [0] : vector<32x128xf32> to vector<128xf32>
    %38 = vector.shape_cast %37 : vector<128xf32> to vector<1x128xf32>
    %cst_15 = arith.constant 3.125000e-02 : f32
    %39 = vector.broadcast %cst_15 : f32 to vector<1x128xf32>
    %40 = arith.mulf %38, %39 : vector<1x128xf32>
    %41 = arith.mulf %36, %36 : vector<32x128xf32>
    %cst_16 = arith.constant dense<0.000000e+00> : vector<128xf32>
    %42 = vector.multi_reduction <add>, %41, %cst_16 [0] : vector<32x128xf32> to vector<128xf32>
    %43 = vector.shape_cast %42 : vector<128xf32> to vector<1x128xf32>
    %cst_17 = arith.constant 3.125000e-02 : f32
    %44 = vector.broadcast %cst_17 : f32 to vector<1x128xf32>
    %45 = arith.mulf %43, %44 : vector<1x128xf32>
    %46 = arith.mulf %40, %40 : vector<1x128xf32>
    %47 = arith.subf %45, %46 : vector<1x128xf32>
    %cst_18 = arith.constant 9.99999974E-6 : f32
    %48 = vector.broadcast %cst_18 : f32 to vector<1x128xf32>
    %49 = arith.addf %47, %48 : vector<1x128xf32>
    %50 = math.rsqrt %49 : vector<1x128xf32>
    %51 = arith.mulf %6, %50 : vector<1x128xf32>
    %52 = arith.mulf %40, %51 : vector<1x128xf32>
    %53 = arith.subf %9, %52 : vector<1x128xf32>
    %54 = vector.broadcast %51 : vector<1x128xf32> to vector<32x128xf32>
    %55 = arith.mulf %36, %54 : vector<32x128xf32>
    %56 = vector.broadcast %53 : vector<1x128xf32> to vector<32x128xf32>
    %57 = arith.addf %55, %56 : vector<32x128xf32>
    %c128 = arith.constant 128 : index
    %c0_19 = arith.constant 0 : index
    %58 = vector.load %arg2[%c128, %c0_19] : memref<768x128xf32, #tpu.memory_space<vmem>>, vector<128x128xf32>
    %cst_20 = arith.constant dense<0.000000e+00> : vector<32x128xf32>
    %59 = tpu.matmul %57, %58, %cst_20 {dimension_numbers = #tpu.dot_dimension_numbers<[1], [0], [0], [1], [0, 0, 1, 1], [], []>} : vector<32x128xf32>, vector<128x128xf32>, vector<32x128xf32> -> vector<32x128xf32>
    %60 = vector.shape_cast %59 : vector<32x128xf32> to vector<2x16x128xf32>
    "tpu.trace_start"() <{level = 10 : i32, message = "bnm,bmc->bnc"}> : () -> ()
    %cst_21 = arith.constant dense<0.000000e+00> : vector<2x16x128xf32>
    %61 = tpu.matmul %24, %60, %cst_21 {dimension_numbers = #tpu.dot_dimension_numbers<[2], [1], [1], [2], [0, 0, 0, 1, 1, 2], [0], [0]>} : vector<2x16x16xf32>, vector<2x16x128xf32>, vector<2x16x128xf32> -> vector<2x16x128xf32>
    "tpu.trace_stop"() : () -> ()
    %62 = vector.shape_cast %61 : vector<2x16x128xf32> to vector<32x128xf32>
    %cst_22 = arith.constant 7.500000e-01 : f32
    %63 = vector.broadcast %cst_22 : f32 to vector<32x128xf32>
    %64 = arith.mulf %63, %59 : vector<32x128xf32>
    %65 = arith.addf %64, %62 : vector<32x128xf32>
    %66 = vector.broadcast %4 : vector<1x128xf32> to vector<32x128xf32>
    %67 = arith.addf %65, %66 : vector<32x128xf32>
    %cst_23 = arith.constant 0.000000e+00 : f32
    %68 = vector.broadcast %cst_23 : f32 to vector<32x128xf32>
    %69 = arith.maximumf %67, %68 : vector<32x128xf32>
    %cst_24 = arith.constant dense<0.000000e+00> : vector<128xf32>
    %70 = vector.multi_reduction <add>, %69, %cst_24 [0] : vector<32x128xf32> to vector<128xf32>
    %71 = vector.shape_cast %70 : vector<128xf32> to vector<1x128xf32>
    %cst_25 = arith.constant 3.125000e-02 : f32
    %72 = vector.broadcast %cst_25 : f32 to vector<1x128xf32>
    %73 = arith.mulf %71, %72 : vector<1x128xf32>
    %74 = arith.mulf %69, %69 : vector<32x128xf32>
    %cst_26 = arith.constant dense<0.000000e+00> : vector<128xf32>
    %75 = vector.multi_reduction <add>, %74, %cst_26 [0] : vector<32x128xf32> to vector<128xf32>
    %76 = vector.shape_cast %75 : vector<128xf32> to vector<1x128xf32>
    %cst_27 = arith.constant 3.125000e-02 : f32
    %77 = vector.broadcast %cst_27 : f32 to vector<1x128xf32>
    %78 = arith.mulf %76, %77 : vector<1x128xf32>
    %79 = arith.mulf %73, %73 : vector<1x128xf32>
    %80 = arith.subf %78, %79 : vector<1x128xf32>
    %cst_28 = arith.constant 9.99999974E-6 : f32
    %81 = vector.broadcast %cst_28 : f32 to vector<1x128xf32>
    %82 = arith.addf %80, %81 : vector<1x128xf32>
    %83 = math.rsqrt %82 : vector<1x128xf32>
    %84 = arith.mulf %7, %83 : vector<1x128xf32>
    %85 = arith.mulf %73, %84 : vector<1x128xf32>
    %86 = arith.subf %10, %85 : vector<1x128xf32>
    %87 = vector.broadcast %84 : vector<1x128xf32> to vector<32x128xf32>
    %88 = arith.mulf %69, %87 : vector<32x128xf32>
    %89 = vector.broadcast %86 : vector<1x128xf32> to vector<32x128xf32>
    %90 = arith.addf %88, %89 : vector<32x128xf32>
    %c256 = arith.constant 256 : index
    %c0_29 = arith.constant 0 : index
    %91 = vector.load %arg2[%c256, %c0_29] : memref<768x128xf32, #tpu.memory_space<vmem>>, vector<128x128xf32>
    %cst_30 = arith.constant dense<0.000000e+00> : vector<32x128xf32>
    %92 = tpu.matmul %90, %91, %cst_30 {dimension_numbers = #tpu.dot_dimension_numbers<[1], [0], [0], [1], [0, 0, 1, 1], [], []>} : vector<32x128xf32>, vector<128x128xf32>, vector<32x128xf32> -> vector<32x128xf32>
    %93 = vector.shape_cast %92 : vector<32x128xf32> to vector<2x16x128xf32>
    "tpu.trace_start"() <{level = 10 : i32, message = "bnm,bmc->bnc"}> : () -> ()
    %cst_31 = arith.constant dense<0.000000e+00> : vector<2x16x128xf32>
    %94 = tpu.matmul %24, %93, %cst_31 {dimension_numbers = #tpu.dot_dimension_numbers<[2], [1], [1], [2], [0, 0, 0, 1, 1, 2], [0], [0]>} : vector<2x16x16xf32>, vector<2x16x128xf32>, vector<2x16x128xf32> -> vector<2x16x128xf32>
    "tpu.trace_stop"() : () -> ()
    %95 = vector.shape_cast %94 : vector<2x16x128xf32> to vector<32x128xf32>
    %cst_32 = arith.constant 7.500000e-01 : f32
    %96 = vector.broadcast %cst_32 : f32 to vector<32x128xf32>
    %97 = arith.mulf %96, %92 : vector<32x128xf32>
    %98 = arith.addf %97, %95 : vector<32x128xf32>
    %99 = vector.broadcast %5 : vector<1x128xf32> to vector<32x128xf32>
    %100 = arith.addf %98, %99 : vector<32x128xf32>
    %cst_33 = arith.constant 0.000000e+00 : f32
    %101 = vector.broadcast %cst_33 : f32 to vector<32x128xf32>
    %102 = arith.maximumf %100, %101 : vector<32x128xf32>
    %cst_34 = arith.constant dense<0.000000e+00> : vector<128xf32>
    %103 = vector.multi_reduction <add>, %102, %cst_34 [0] : vector<32x128xf32> to vector<128xf32>
    %104 = vector.shape_cast %103 : vector<128xf32> to vector<1x128xf32>
    %cst_35 = arith.constant 3.125000e-02 : f32
    %105 = vector.broadcast %cst_35 : f32 to vector<1x128xf32>
    %106 = arith.mulf %104, %105 : vector<1x128xf32>
    %107 = arith.mulf %102, %102 : vector<32x128xf32>
    %cst_36 = arith.constant dense<0.000000e+00> : vector<128xf32>
    %108 = vector.multi_reduction <add>, %107, %cst_36 [0] : vector<32x128xf32> to vector<128xf32>
    %109 = vector.shape_cast %108 : vector<128xf32> to vector<1x128xf32>
    %cst_37 = arith.constant 3.125000e-02 : f32
    %110 = vector.broadcast %cst_37 : f32 to vector<1x128xf32>
    %111 = arith.mulf %109, %110 : vector<1x128xf32>
    %112 = arith.mulf %106, %106 : vector<1x128xf32>
    %113 = arith.subf %111, %112 : vector<1x128xf32>
    %cst_38 = arith.constant 9.99999974E-6 : f32
    %114 = vector.broadcast %cst_38 : f32 to vector<1x128xf32>
    %115 = arith.addf %113, %114 : vector<1x128xf32>
    %116 = math.rsqrt %115 : vector<1x128xf32>
    %117 = arith.mulf %8, %116 : vector<1x128xf32>
    %118 = arith.mulf %106, %117 : vector<1x128xf32>
    %119 = arith.subf %11, %118 : vector<1x128xf32>
    %120 = vector.broadcast %117 : vector<1x128xf32> to vector<32x128xf32>
    %121 = arith.mulf %102, %120 : vector<32x128xf32>
    %122 = vector.broadcast %119 : vector<1x128xf32> to vector<32x128xf32>
    %123 = arith.addf %121, %122 : vector<32x128xf32>
    %124 = tpu.concatenate %57, %90, %123 in 1 : vector<32x128xf32>, vector<32x128xf32>, vector<32x128xf32> -> vector<32x384xf32>
    %c384 = arith.constant 384 : index
    %c0_39 = arith.constant 0 : index
    %125 = vector.load %arg2[%c384, %c0_39] : memref<768x128xf32, #tpu.memory_space<vmem>>, vector<384x128xf32>
    %cst_40 = arith.constant dense<0.000000e+00> : vector<32x128xf32>
    %126 = tpu.matmul %124, %125, %cst_40 {dimension_numbers = #tpu.dot_dimension_numbers<[1], [0], [0], [1], [0, 0, 1, 1], [], []>} : vector<32x384xf32>, vector<384x128xf32>, vector<32x128xf32> -> vector<32x128xf32>
    %127 = vector.broadcast %12 : vector<1x128xf32> to vector<32x128xf32>
    %128 = arith.addf %126, %127 : vector<32x128xf32>
    %cst_41 = arith.constant 0.000000e+00 : f32
    %129 = vector.broadcast %cst_41 : f32 to vector<32x128xf32>
    %130 = arith.maximumf %128, %129 : vector<32x128xf32>
    %c0_42 = arith.constant 0 : index
    %c0_43 = arith.constant 0 : index
    %131 = vector.load %arg4[%c0_42, %c0_43] : memref<32x128xf32, #tpu.memory_space<vmem>>, vector<32x128xf32>
    tpu.vector_store %arg4[%c0_42, %c0_43], %130 {strides = array<i32>} : memref<32x128xf32, #tpu.memory_space<vmem>>, vector<32x128xf32>,
    return
  }
}

</mosaic_0001>

<llo_original>
// kernel: tpu_custom_call.1
$region0: #{tpu_custom_call.1}
  #allocation0 [shape = 'u32[]', space=smem, size = 0x4, offset = 0x4, fixed_abs, tag = 'smem constant byte address 0x4 - core index']
  #allocation1 [shape = 'u32[144,128]{1,0:T(1,128)}', space=vmem, size = 0x12000, scoped, tag = 'internal scratch']
  %s0 = inlined_call_operand.hbm [shape: f32[32,128], index: 0, kind: input, shape index: {}]
  %s1 = inlined_call_operand.hbm [shape: f32[2,16,16], index: 1, kind: input, shape index: {}]
  %s2 = inlined_call_operand.hbm [shape: f32[768,128], index: 2, kind: input, shape index: {}]
  %s3 = inlined_call_operand.hbm [shape: f32[10,128], index: 3, kind: input, shape index: {}]
  %s4 = inlined_call_operand.hbm [shape: f32[32,128], index: 4, kind: output, shape index: {}]
  %s5 = sld [smem:[#allocation0]]
  $region42: #{tpu_custom_call.1} parent=0
    _
  %s7 = ssub.s32 1, %s5
  %s8 = scalar_select 0, %s7, %s5
  $region1: #{tpu_custom_call.1} parent=0
    #allocation2 [shape = 'u8[16384]{0}', space=vmem, size = 0x4000, scoped, tag = 'input window, operand 0, single buffered']
    #allocation3 [shape = 's32[1]{0}', space=sflag, size = 0x4, scoped, tag = 'scoped memory for tpu_custom_call.1']
    #allocation4 [shape = 's32[1]{0}', space=sflag, size = 0x4, scoped, tag = 'scoped memory for tpu_custom_call.1']
    #allocation5 [shape = 'u8[16384]{0}', space=vmem, size = 0x4000, scoped, tag = 'input window, operand 1, single buffered']
    #allocation6 [shape = 's32[1]{0}', space=sflag, size = 0x4, scoped, tag = 'scoped memory for tpu_custom_call.1']
    #allocation7 [shape = 'u8[393216]{0}', space=vmem, size = 0x60000, scoped, tag = 'input window, operand 2, single buffered']
    #allocation8 [shape = 'u8[8192]{0}', space=vmem, size = 0x2000, scoped, tag = 'input window, operand 3, single buffered']
    #allocation9 [shape = 's32[1]{0}', space=sflag, size = 0x4, scoped, tag = 'scoped memory for tpu_custom_call.1']
    #allocation10 [shape = 'u8[16384]{0}', space=vmem, size = 0x4000, scoped, tag = 'output window, operand 0, single buffered']
    %9 = vsyncpa [#allocation3], 0
    %10 = vsyncpa [#allocation6], 0
    %11 = vsyncpa [#allocation9], 0
    %12 = vsyncpa [#allocation4], 0
    // Predicated region
    $region2: #{tpu_custom_call.1} parent=1 // pred_check
      _
    $region3: #{tpu_custom_call.1} parent=1 // pred_check_branch
      %14 = sbr.rel (0) target = $region5
    $region4: #{tpu_custom_call.1} parent=1 // pred_region
      %s16 = ssub.s32 512, 512
      %17 = vsyncadd [#allocation3], %s16
      %s18 = sshll.u32 [#allocation2], 4
      %s19 = int_to_ptr.vmem [resolvable:$true] %s18
      %24 = dma.hbm_to_vmem [thread:$0]  %s0, 512, %s19, [#allocation3], 128, 128, 8
    $region5: #{tpu_custom_call.1} parent=1 // pred_fallthru
      _
    // Predicated region
    $region6: #{tpu_custom_call.1} parent=1 // pred_check
      _
    $region7: #{tpu_custom_call.1} parent=1 // pred_check_branch
      %26 = sbr.rel (0) target = $region9
    $region8: #{tpu_custom_call.1} parent=1 // pred_region
      %s28 = ssub.s32 512, 512
      %29 = vsyncadd [#allocation6], %s28
      %s30 = sshll.u32 [#allocation5], 4
      %s31 = int_to_ptr.vmem [resolvable:$true] %s30
      %36 = dma.hbm_to_vmem [thread:$0]  %s1, 512, %s31, [#allocation6], 128, 128, 8
    $region9: #{tpu_custom_call.1} parent=1 // pred_fallthru
      _
    // Predicated region
    $region10: #{tpu_custom_call.1} parent=1 // pred_check
      _
    $region11: #{tpu_custom_call.1} parent=1 // pred_check_branch
      %38 = sbr.rel (0) target = $region13
    $region12: #{tpu_custom_call.1} parent=1 // pred_region
      %s40 = ssub.s32 12288, 12288
      %41 = vsyncadd [#allocation6], %s40
      %s42 = sshll.u32 [#allocation7], 4
      %s43 = int_to_ptr.vmem [resolvable:$true] %s42
      %48 = dma.hbm_to_vmem [thread:$0]  %s2, 12288, %s43, [#allocation6], 128, 128, 8
    $region13: #{tpu_custom_call.1} parent=1 // pred_fallthru
      _
    // Predicated region
    $region14: #{tpu_custom_call.1} parent=1 // pred_check
      _
    $region15: #{tpu_custom_call.1} parent=1 // pred_check_branch
      %50 = sbr.rel (0) target = $region17
    $region16: #{tpu_custom_call.1} parent=1 // pred_region
      %s52 = ssub.s32 256, 256
      %53 = vsyncadd [#allocation9], %s52
      %s54 = sshll.u32 [#allocation8], 4
      %s55 = int_to_ptr.vmem [resolvable:$true] %s54
      %60 = dma.hbm_to_vmem [thread:$0]  %s3, 256, %s55, [#allocation9], 128, 128, 8
    $region17: #{tpu_custom_call.1} parent=1 // pred_fallthru
      _
    // Predicated region
    $region18: #{tpu_custom_call.1} parent=1 // pred_check
      _
    $region19: #{tpu_custom_call.1} parent=1 // pred_check_branch
      %62 = sbr.rel (0) target = $region21
    $region20: #{tpu_custom_call.1} parent=1 // pred_region
      %63 = dma.done [#allocation3], 512
    $region21: #{tpu_custom_call.1} parent=1 // pred_fallthru
      _
    // Predicated region
    $region22: #{tpu_custom_call.1} parent=1 // pred_check
      _
    $region23: #{tpu_custom_call.1} parent=1 // pred_check_branch
      %65 = sbr.rel (0) target = $region25
    $region24: #{tpu_custom_call.1} parent=1 // pred_region
      %66 = dma.done [#allocation6], 512
    $region25: #{tpu_custom_call.1} parent=1 // pred_fallthru
      _
    // Predicated region
    $region26: #{tpu_custom_call.1} parent=1 // pred_check
      _
    $region27: #{tpu_custom_call.1} parent=1 // pred_check_branch
      %68 = sbr.rel (0) target = $region29
    $region28: #{tpu_custom_call.1} parent=1 // pred_region
      %69 = dma.done [#allocation6], 12288
    $region29: #{tpu_custom_call.1} parent=1 // pred_fallthru
      _
    // Predicated region
    $region30: #{tpu_custom_call.1} parent=1 // pred_check
      _
    $region31: #{tpu_custom_call.1} parent=1 // pred_check_branch
      %71 = sbr.rel (0) target = $region33
    $region32: #{tpu_custom_call.1} parent=1 // pred_region
      %72 = dma.done [#allocation9], 256
    $region33: #{tpu_custom_call.1} parent=1 // pred_fallthru
      _
    %v73 = vld [vmem:[#allocation2] sm:$0xff]
    %v74 = vld [vmem:[#allocation2 + $0x8] sm:$0xff]
    %v75 = vld [vmem:[#allocation2 + $0x10] sm:$0xff]
    %v76 = vld [vmem:[#allocation2 + $0x18] sm:$0xff]
    %v77 = vld [vmem:[#allocation5] sm:$0xff]
    %v78 = vld [vmem:[#allocation5 + $0x8] sm:$0xff]
    %v79 = vld [vmem:[#allocation5 + $0x10] sm:$0xff]
    %v80 = vld [vmem:[#allocation5 + $0x18] sm:$0xff]
    %v81 = vld [vmem:[#allocation8] sm:$0xff]
    %v82 = vld [vmem:[#allocation8 + $0x8] sm:$0x3]
    %vm83 = vcmask 130048
    %v84 = vsel %vm83, %v77, 0.0
    %85 = vadd.xlane.f32.xlu0 %v84
    %v86 = vpop.xlane.xlu0 %85
    %v87 = vsel %vm83, %v78, 0.0
    %88 = vadd.xlane.f32.xlu0 %v87
    %v89 = vpop.xlane.xlu0 %88
    %v90 = vsel %vm83, %v79, 0.0
    %91 = vadd.xlane.f32.xlu0 %v90
    %v92 = vpop.xlane.xlu0 %91
    %v93 = vsel %vm83, %v80, 0.0
    %94 = vadd.xlane.f32.xlu0 %v93
    %v95 = vpop.xlane.xlu0 %94
    %v96 = vmax.f32 %v86, 1.0
    %v97 = vmax.f32 %v89, 1.0
    %v98 = vmax.f32 %v92, 1.0
    %v99 = vmax.f32 %v95, 1.0
    %v100 = vmul.f32 %v96, 2.0
    %v101 = vmul.f32 %v97, 2.0
    %v102 = vmul.f32 %v98, 2.0
    %v103 = vmul.f32 %v99, 2.0
    %v104 = vrsqrt.pop %v100
    %v105 = vrsqrt.pop %v101
    %v106 = vrsqrt.pop %v102
    %v107 = vrsqrt.pop %v103
    %v108 = vmul.f32 %v104, %v77
    %v109 = vmul.f32 %v105, %v78
    %v110 = vmul.f32 %v106, %v79
    %v111 = vmul.f32 %v107, %v80
    %v116 = vlaneseq
    %v117 = vand.u32 %v116, 127
    %v118 = vlaneseq
    %v119 = vshrl.u32 %v118, 7
    %v120 = vsub.s32 %v117, %v119
    %v121 = vrot.slane %v104, %v120
    %v122 = vadd.s32 %v117, 4294967288
    %v123 = vlaneseq
    %v124 = vshrl.u32 %v123, 7
    %v125 = vsub.s32 %v122, %v124
    %v126 = vrot.slane %v105, %v125
    %vm127 = vcmask 130112
    %v128 = vsel %vm127, %v126, %v121
    %v129 = vlaneseq
    %v130 = vshrl.u32 %v129, 7
    %v131 = vsub.s32 %v117, %v130
    %v132 = vrot.slane %v106, %v131
    %v133 = vlaneseq
    %v134 = vshrl.u32 %v133, 7
    %v135 = vsub.s32 %v122, %v134
    %v136 = vrot.slane %v107, %v135
    %v137 = vsel %vm127, %v136, %v132
    %vm138 = vcmask 1042434
    %v139 = vsel %vm138, %v128, %v128
    %vm140 = vcmask 1043459
    %v141 = vsel %vm140, %v128, %v139
    %vm142 = vcmask 1044484
    %v143 = vsel %vm142, %v128, %v141
    %vm144 = vcmask 1045509
    %v145 = vsel %vm144, %v128, %v143
    %vm146 = vcmask 1046534
    %v147 = vsel %vm146, %v128, %v145
    %vm148 = vcmask 1047559
    %v149 = vsel %vm148, %v128, %v147
    %v150 = vsel %vm138, %v137, %v137
    %v151 = vsel %vm140, %v137, %v150
    %v152 = vsel %vm142, %v137, %v151
    %v153 = vsel %vm144, %v137, %v152
    %v154 = vsel %vm146, %v137, %v153
    %v155 = vsel %vm148, %v137, %v154
    %v158 = vmul.f32 %v108, %v149
    %v159 = vmul.f32 %v109, %v149
    %v160 = vmul.f32 %v110, %v155
    %v161 = vmul.f32 %v111, %v155
    %v162 = vld [vmem:[#allocation7] sm:$0xff]
    %v163 = vld [vmem:[#allocation7 + $0x8] sm:$0xff]
    %v164 = vld [vmem:[#allocation7 + $0x10] sm:$0xff]
    %v165 = vld [vmem:[#allocation7 + $0x18] sm:$0xff]
    %v166 = vld [vmem:[#allocation7 + $0x20] sm:$0xff]
    %v167 = vld [vmem:[#allocation7 + $0x28] sm:$0xff]
    %v168 = vld [vmem:[#allocation7 + $0x30] sm:$0xff]
    %v169 = vld [vmem:[#allocation7 + $0x38] sm:$0xff]
    %v170 = vld [vmem:[#allocation7 + $0x40] sm:$0xff]
    %v171 = vld [vmem:[#allocation7 + $0x48] sm:$0xff]
    %v172 = vld [vmem:[#allocation7 + $0x50] sm:$0xff]
    %v173 = vld [vmem:[#allocation7 + $0x58] sm:$0xff]
    %v174 = vld [vmem:[#allocation7 + $0x60] sm:$0xff]
    %v175 = vld [vmem:[#allocation7 + $0x68] sm:$0xff]
    %v176 = vld [vmem:[#allocation7 + $0x70] sm:$0xff]
    %v177 = vld [vmem:[#allocation7 + $0x78] sm:$0xff]
    %178 = vmatprep.subr.mxu0 0.0
    %179 = vmatpush1.msra.mxu0 %v162
    %180 = vmatprep.subr.mxu0 0.0
    %181 = vmatpush1.msra.mxu0 %v163
    %182 = vmatprep.subr.mxu0 0.0
    %183 = vmatpush1.msra.mxu0 %v164
    %184 = vmatprep.subr.mxu0 0.0
    %185 = vmatpush1.msra.mxu0 %v165
    %186 = vmatprep.subr.mxu0 0.0
    %187 = vmatpush1.msra.mxu0 %v166
    %188 = vmatprep.subr.mxu0 0.0
    %189 = vmatpush1.msra.mxu0 %v167
    %190 = vmatprep.subr.mxu0 0.0
    %191 = vmatpush1.msra.mxu0 %v168
    %192 = vmatprep.subr.mxu0 0.0
    %193 = vmatpush1.msra.mxu0 %v169
    %194 = vmatprep.subr.mxu0 0.0
    %195 = vmatpush1.msra.mxu0 %v170
    %196 = vmatprep.subr.mxu0 0.0
    %197 = vmatpush1.msra.mxu0 %v171
    %198 = vmatprep.subr.mxu0 0.0
    %199 = vmatpush1.msra.mxu0 %v172
    %200 = vmatprep.subr.mxu0 0.0
    %201 = vmatpush1.msra.mxu0 %v173
    %202 = vmatprep.subr.mxu0 0.0
    %203 = vmatpush1.msra.mxu0 %v174
    %204 = vmatprep.subr.mxu0 0.0
    %205 = vmatpush1.msra.mxu0 %v175
    %206 = vmatprep.subr.mxu0 0.0
    %207 = vmatpush1.msra.mxu0 %v176
    %208 = vmatprep.subr.mxu0 0.0
    %209 = vmatpush1.msra.mxu0 %v177
    %210 = vmatprep.subr.mxu0 0.0
    %211 = vmatpush1.msra.mxu0 0.0
    %212 = vmatprep.subr.mxu0 0.0
    %213 = vmatpush1.msra.mxu0 0.0
    %214 = vmatprep.subr.mxu0 0.0
    %215 = vmatpush1.msra.mxu0 0.0
    %216 = vmatprep.subr.mxu0 0.0
    %217 = vmatpush1.msra.mxu0 0.0
    %218 = vmatprep.subr.mxu0 0.0
    %219 = vmatpush1.msra.mxu0 0.0
    %220 = vmatprep.subr.mxu0 0.0
    %221 = vmatpush1.msra.mxu0 0.0
    %222 = vmatprep.subr.mxu0 0.0
    %223 = vmatpush1.msra.mxu0 0.0
    %224 = vmatprep.subr.mxu0 0.0
    %225 = vmatpush1.msra.mxu0 0.0
    %226 = vmatprep.subr.mxu0 0.0
    %227 = vmatpush1.msra.mxu0 0.0
    %228 = vmatprep.subr.mxu0 0.0
    %229 = vmatpush1.msra.mxu0 0.0
    %230 = vmatprep.subr.mxu0 0.0
    %231 = vmatpush1.msra.mxu0 0.0
    %232 = vmatprep.subr.mxu0 0.0
    %233 = vmatpush1.msra.mxu0 0.0
    %234 = vmatprep.subr.mxu0 0.0
    %235 = vmatpush1.msra.mxu0 0.0
    %236 = vmatprep.subr.mxu0 0.0
    %237 = vmatpush1.msra.mxu0 0.0
    %238 = vmatprep.subr.mxu0 0.0
    %239 = vmatpush1.msra.mxu0 0.0
    %240 = vmatprep.subr.mxu0 0.0
    %241 = vmatpush1.msra.mxu0 0.0
    %242 = vmatprep.mubr.f32.mxu0 0.0
    %243 = vmatmul.mubr.f32.gmra.mrb[0].mxu0 %v73
    %v244 = vpop.f32.mrb[0].mxu0
    %v245 = vadd.f32 0.0, %v244
    %v246 = vpop.f32.mrb[0].mxu0
    %247 = vmatprep.mubr.f32.mxu0 0.0
    %248 = vmatmul.mubr.f32.gmra.mrb[0].mxu0 %v74
    %v249 = vpop.f32.mrb[0].mxu0
    %v250 = vadd.f32 0.0, %v249
    %v251 = vpop.f32.mrb[0].mxu0
    %252 = vmatprep.mubr.f32.mxu0 0.0
    %253 = vmatmul.mubr.f32.gmra.mrb[0].mxu0 %v75
    %v254 = vpop.f32.mrb[0].mxu0
    %v255 = vadd.f32 0.0, %v254
    %v256 = vpop.f32.mrb[0].mxu0
    %257 = vmatprep.mubr.f32.mxu0 0.0
    %258 = vmatmul.mubr.f32.gmra.mrb[0].mxu0 %v76
    %v259 = vpop.f32.mrb[0].mxu0
    %v260 = vadd.f32 0.0, %v259
    %v261 = vpop.f32.mrb[0].mxu0
    %262 = vdwg.mxu0
    %v264 = vsel %vm83, %v158, 0
    %v267 = vsel %vm83, %v159, 0
    %269 = vmatprep.subr.mxu0 0.0
    %270 = vmatpush1.msra.mxu0 %v245
    %271 = vmatprep.subr.mxu0 0.0
    %272 = vmatpush1.msra.mxu0 %v250
    %273 = vmatprep.subr.mxu0 0.0
    %274 = vmatpush1.msra.mxu0 0.0
    %275 = vmatprep.subr.mxu0 0.0
    %276 = vmatpush1.msra.mxu0 0.0
    %277 = vmatprep.subr.mxu0 0.0
    %278 = vmatpush1.msra.mxu0 0.0
    %279 = vmatprep.subr.mxu0 0.0
    %280 = vmatpush1.msra.mxu0 0.0
    %281 = vmatprep.subr.mxu0 0.0
    %282 = vmatpush1.msra.mxu0 0.0
    %283 = vmatprep.subr.mxu0 0.0
    %284 = vmatpush1.msra.mxu0 0.0
    %285 = vmatprep.subr.mxu0 0.0
    %286 = vmatpush1.msra.mxu0 0.0
    %287 = vmatprep.subr.mxu0 0.0
    %288 = vmatpush1.msra.mxu0 0.0
    %289 = vmatprep.subr.mxu0 0.0
    %290 = vmatpush1.msra.mxu0 0.0
    %291 = vmatprep.subr.mxu0 0.0
    %292 = vmatpush1.msra.mxu0 0.0
    %293 = vmatprep.subr.mxu0 0.0
    %294 = vmatpush1.msra.mxu0 0.0
    %295 = vmatprep.subr.mxu0 0.0
    %296 = vmatpush1.msra.mxu0 0.0
    %297 = vmatprep.subr.mxu0 0.0
    %298 = vmatpush1.msra.mxu0 0.0
    %299 = vmatprep.subr.mxu0 0.0
    %300 = vmatpush1.msra.mxu0 0.0
    %301 = vmatprep.subr.mxu0 0.0
    %302 = vmatpush1.msra.mxu0 0.0
    %303 = vmatprep.subr.mxu0 0.0
    %304 = vmatpush1.msra.mxu0 0.0
    %305 = vmatprep.subr.mxu0 0.0
    %306 = vmatpush1.msra.mxu0 0.0
    %307 = vmatprep.subr.mxu0 0.0
    %308 = vmatpush1.msra.mxu0 0.0
    %309 = vmatprep.subr.mxu0 0.0
    %310 = vmatpush1.msra.mxu0 0.0
    %311 = vmatprep.subr.mxu0 0.0
    %312 = vmatpush1.msra.mxu0 0.0
    %313 = vmatprep.subr.mxu0 0.0
    %314 = vmatpush1.msra.mxu0 0.0
    %315 = vmatprep.subr.mxu0 0.0
    %316 = vmatpush1.msra.mxu0 0.0
    %317 = vmatprep.subr.mxu0 0.0
    %318 = vmatpush1.msra.mxu0 0.0
    %319 = vmatprep.subr.mxu0 0.0
    %320 = vmatpush1.msra.mxu0 0.0
    %321 = vmatprep.subr.mxu0 0.0
    %322 = vmatpush1.msra.mxu0 0.0
    %323 = vmatprep.subr.mxu0 0.0
    %324 = vmatpush1.msra.mxu0 0.0
    %325 = vmatprep.subr.mxu0 0.0
    %326 = vmatpush1.msra.mxu0 0.0
    %327 = vmatprep.subr.mxu0 0.0
    %328 = vmatpush1.msra.mxu0 0.0
    %329 = vmatprep.subr.mxu0 0.0
    %330 = vmatpush1.msra.mxu0 0.0
    %331 = vmatprep.subr.mxu0 0.0
    %332 = vmatpush1.msra.mxu0 0.0
    %333 = vmatprep.mubr.f32.mxu0 0.0
    %334 = vmatmul.mubr.f32.gmra.mrb[0].mxu0 %v264
    %v335 = vpop.f32.mrb[0].mxu0
    %v336 = vadd.f32 0.0, %v335
    %v337 = vpop.f32.mrb[0].mxu0
    %338 = vmatprep.mubr.f32.mxu0 0.0
    %339 = vmatmul.mubr.f32.gmra.mrb[0].mxu0 %v267
    %v340 = vpop.f32.mrb[0].mxu0
    %v341 = vadd.f32 0.0, %v340
    %v342 = vpop.f32.mrb[0].mxu0
    %343 = vdwg.mxu0
    %v345 = vsel %vm83, %v160, 0
    %v348 = vsel %vm83, %v161, 0
    %350 = vmatprep.subr.mxu0 0.0
    %351 = vmatpush1.msra.mxu0 %v255
    %352 = vmatprep.subr.mxu0 0.0
    %353 = vmatpush1.msra.mxu0 %v260
    %354 = vmatprep.subr.mxu0 0.0
    %355 = vmatpush1.msra.mxu0 0.0
    %356 = vmatprep.subr.mxu0 0.0
    %357 = vmatpush1.msra.mxu0 0.0
    %358 = vmatprep.subr.mxu0 0.0
    %359 = vmatpush1.msra.mxu0 0.0
    %360 = vmatprep.subr.mxu0 0.0
    %361 = vmatpush1.msra.mxu0 0.0
    %362 = vmatprep.subr.mxu0 0.0
    %363 = vmatpush1.msra.mxu0 0.0
    %364 = vmatprep.subr.mxu0 0.0
    %365 = vmatpush1.msra.mxu0 0.0
    %366 = vmatprep.subr.mxu0 0.0
    %367 = vmatpush1.msra.mxu0 0.0
    %368 = vmatprep.subr.mxu0 0.0
    %369 = vmatpush1.msra.mxu0 0.0
    %370 = vmatprep.subr.mxu0 0.0
    %371 = vmatpush1.msra.mxu0 0.0
    %372 = vmatprep.subr.mxu0 0.0
    %373 = vmatpush1.msra.mxu0 0.0
    %374 = vmatprep.subr.mxu0 0.0
    %375 = vmatpush1.msra.mxu0 0.0
    %376 = vmatprep.subr.mxu0 0.0
    %377 = vmatpush1.msra.mxu0 0.0
    %378 = vmatprep.subr.mxu0 0.0
    %379 = vmatpush1.msra.mxu0 0.0
    %380 = vmatprep.subr.mxu0 0.0
    %381 = vmatpush1.msra.mxu0 0.0
    %382 = vmatprep.subr.mxu0 0.0
    %383 = vmatpush1.msra.mxu0 0.0
    %384 = vmatprep.subr.mxu0 0.0
    %385 = vmatpush1.msra.mxu0 0.0
    %386 = vmatprep.subr.mxu0 0.0
    %387 = vmatpush1.msra.mxu0 0.0
    %388 = vmatprep.subr.mxu0 0.0
    %389 = vmatpush1.msra.mxu0 0.0
    %390 = vmatprep.subr.mxu0 0.0
    %391 = vmatpush1.msra.mxu0 0.0
    %392 = vmatprep.subr.mxu0 0.0
    %393 = vmatpush1.msra.mxu0 0.0
    %394 = vmatprep.subr.mxu0 0.0
    %395 = vmatpush1.msra.mxu0 0.0
    %396 = vmatprep.subr.mxu0 0.0
    %397 = vmatpush1.msra.mxu0 0.0
    %398 = vmatprep.subr.mxu0 0.0
    %399 = vmatpush1.msra.mxu0 0.0
    %400 = vmatprep.subr.mxu0 0.0
    %401 = vmatpush1.msra.mxu0 0.0
    %402 = vmatprep.subr.mxu0 0.0
    %403 = vmatpush1.msra.mxu0 0.0
    %404 = vmatprep.subr.mxu0 0.0
    %405 = vmatpush1.msra.mxu0 0.0
    %406 = vmatprep.subr.mxu0 0.0
    %407 = vmatpush1.msra.mxu0 0.0
    %408 = vmatprep.subr.mxu0 0.0
    %409 = vmatpush1.msra.mxu0 0.0
    %410 = vmatprep.subr.mxu0 0.0
    %411 = vmatpush1.msra.mxu0 0.0
    %412 = vmatprep.subr.mxu0 0.0
    %413 = vmatpush1.msra.mxu0 0.0
    %414 = vmatprep.mubr.f32.mxu0 0.0
    %415 = vmatmul.mubr.f32.gmra.mrb[0].mxu0 %v345
    %v416 = vpop.f32.mrb[0].mxu0
    %v417 = vadd.f32 0.0, %v416
    %v418 = vpop.f32.mrb[0].mxu0
    %419 = vmatprep.mubr.f32.mxu0 0.0
    %420 = vmatmul.mubr.f32.gmra.mrb[0].mxu0 %v348
    %v421 = vpop.f32.mrb[0].mxu0
    %v422 = vadd.f32 0.0, %v421
    %v423 = vpop.f32.mrb[0].mxu0
    %424 = vdwg.mxu0
    %v425 = vmul.f32 %v245, 0.75
    %v426 = vmul.f32 %v250, 0.75
    %v427 = vmul.f32 %v255, 0.75
    %v428 = vmul.f32 %v260, 0.75
    %v429 = vadd.f32 %v425, %v336
    %v430 = vadd.f32 %v426, %v341
    %v431 = vadd.f32 %v427, %v417
    %v432 = vadd.f32 %v428, %v422
    %v433 = vlaneseq
    %v434 = vshrl.u32 %v433, 7
    %v435 = vsub.s32 0, %v434
    %v436 = vrot.slane %v81, %v435
    %v437 = vadd.f32 %v429, %v436
    %v438 = vadd.f32 %v430, %v436
    %v439 = vadd.f32 %v431, %v436
    %v440 = vadd.f32 %v432, %v436
    %v441 = vmax.f32 %v437, 0.0
    %v442 = vmax.f32 %v438, 0.0
    %v443 = vmax.f32 %v439, 0.0
    %v444 = vmax.f32 %v440, 0.0
    %v445 = vadd.f32 %v441, %v442
    %v446 = vadd.f32 %v445, %v443
    %v447 = vadd.f32 %v446, %v444
    %v448 = vrot.slane %v447, 4
    %v449 = vadd.f32 %v447, %v448
    %v450 = vrot.slane %v449, 2
    %v451 = vadd.f32 %v449, %v450
    %v452 = vrot.slane %v451, 1
    %v453 = vadd.f32 %v451, %v452
    %v454 = vmul.f32 %v453, 0.03125
    %v455 = vmul.f32 %v441, %v441
    %v456 = vmul.f32 %v442, %v442
    %v457 = vmul.f32 %v443, %v443
    %v458 = vmul.f32 %v444, %v444
    %v459 = vadd.f32 %v455, %v456
    %v460 = vadd.f32 %v459, %v457
    %v461 = vadd.f32 %v460, %v458
    %v462 = vrot.slane %v461, 4
    %v463 = vadd.f32 %v461, %v462
    %v464 = vrot.slane %v463, 2
    %v465 = vadd.f32 %v463, %v464
    %v466 = vrot.slane %v465, 1
    %v467 = vadd.f32 %v465, %v466
    %v468 = vmul.f32 %v467, 0.03125
    %v469 = vmul.f32 %v454, %v454
    %v470 = vsub.f32 %v468, %v469
    %v471 = vadd.f32 %v470, 1e-05
    %v472 = vrsqrt.pop %v471
    %v473 = vmul.f32 %v81, %v472
    %v474 = vmul.f32 %v454, %v473
    %v476 = vrot.slane %v474, 5
    %v478 = vsub.f32 %v81, %v476
    %v479 = vlaneseq
    %v480 = vshrl.u32 %v479, 7
    %v481 = vsub.s32 3, %v480
    %v482 = vrot.slane %v473, %v481
    %v483 = vmul.f32 %v441, %v482
    %v484 = vmul.f32 %v442, %v482
    %v485 = vmul.f32 %v443, %v482
    %v486 = vmul.f32 %v444, %v482
    %v487 = vlaneseq
    %v488 = vshrl.u32 %v487, 7
    %v489 = vsub.s32 6, %v488
    %v490 = vrot.slane %v478, %v489
    %v491 = vadd.f32 %v483, %v490
    %v492 = vadd.f32 %v484, %v490
    %v493 = vadd.f32 %v485, %v490
    %v494 = vadd.f32 %v486, %v490
    %v495 = vld [vmem:[#allocation7 + $0x80] sm:$0xff]
    %v496 = vld [vmem:[#allocation7 + $0x88] sm:$0xff]
    %v497 = vld [vmem:[#allocation7 + $0x90] sm:$0xff]
    %v498 = vld [vmem:[#allocation7 + $0x98] sm:$0xff]
    %v499 = vld [vmem:[#allocation7 + $0xa0] sm:$0xff]
    %v500 = vld [vmem:[#allocation7 + $0xa8] sm:$0xff]
    %v501 = vld [vmem:[#allocation7 + $0xb0] sm:$0xff]
    %v502 = vld [vmem:[#allocation7 + $0xb8] sm:$0xff]
    %v503 = vld [vmem:[#allocation7 + $0xc0] sm:$0xff]
    %v504 = vld [vmem:[#allocation7 + $0xc8] sm:$0xff]
    %v505 = vld [vmem:[#allocation7 + $0xd0] sm:$0xff]
    %v506 = vld [vmem:[#allocation7 + $0xd8] sm:$0xff]
    %v507 = vld [vmem:[#allocation7 + $0xe0] sm:$0xff]
    %v508 = vld [vmem:[#allocation7 + $0xe8] sm:$0xff]
    %v509 = vld [vmem:[#allocation7 + $0xf0] sm:$0xff]
    %v510 = vld [vmem:[#allocation7 + $0xf8] sm:$0xff]
    %511 = vmatprep.subr.mxu0 0.0
    %512 = vmatpush1.msra.mxu0 %v495
    %513 = vmatprep.subr.mxu0 0.0
    %514 = vmatpush1.msra.mxu0 %v496
    %515 = vmatprep.subr.mxu0 0.0
    %516 = vmatpush1.msra.mxu0 %v497
    %517 = vmatprep.subr.mxu0 0.0
    %518 = vmatpush1.msra.mxu0 %v498
    %519 = vmatprep.subr.mxu0 0.0
    %520 = vmatpush1.msra.mxu0 %v499
    %521 = vmatprep.subr.mxu0 0.0
    %522 = vmatpush1.msra.mxu0 %v500
    %523 = vmatprep.subr.mxu0 0.0
    %524 = vmatpush1.msra.mxu0 %v501
    %525 = vmatprep.subr.mxu0 0.0
    %526 = vmatpush1.msra.mxu0 %v502
    %527 = vmatprep.subr.mxu0 0.0
    %528 = vmatpush1.msra.mxu0 %v503
    %529 = vmatprep.subr.mxu0 0.0
    %530 = vmatpush1.msra.mxu0 %v504
    %531 = vmatprep.subr.mxu0 0.0
    %532 = vmatpush1.msra.mxu0 %v505
    %533 = vmatprep.subr.mxu0 0.0
    %534 = vmatpush1.msra.mxu0 %v506
    %535 = vmatprep.subr.mxu0 0.0
    %536 = vmatpush1.msra.mxu0 %v507
    %537 = vmatprep.subr.mxu0 0.0
    %538 = vmatpush1.msra.mxu0 %v508
    %539 = vmatprep.subr.mxu0 0.0
    %540 = vmatpush1.msra.mxu0 %v509
    %541 = vmatprep.subr.mxu0 0.0
    %542 = vmatpush1.msra.mxu0 %v510
    %543 = vmatprep.subr.mxu0 0.0
    %544 = vmatpush1.msra.mxu0 0.0
    %545 = vmatprep.subr.mxu0 0.0
    %546 = vmatpush1.msra.mxu0 0.0
    %547 = vmatprep.subr.mxu0 0.0
    %548 = vmatpush1.msra.mxu0 0.0
    %549 = vmatprep.subr.mxu0 0.0
    %550 = vmatpush1.msra.mxu0 0.0
    %551 = vmatprep.subr.mxu0 0.0
    %552 = vmatpush1.msra.mxu0 0.0
    %553 = vmatprep.subr.mxu0 0.0
    %554 = vmatpush1.msra.mxu0 0.0
    %555 = vmatprep.subr.mxu0 0.0
    %556 = vmatpush1.msra.mxu0 0.0
    %557 = vmatprep.subr.mxu0 0.0
    %558 = vmatpush1.msra.mxu0 0.0
    %559 = vmatprep.subr.mxu0 0.0
    %560 = vmatpush1.msra.mxu0 0.0
    %561 = vmatprep.subr.mxu0 0.0
    %562 = vmatpush1.msra.mxu0 0.0
    %563 = vmatprep.subr.mxu0 0.0
    %564 = vmatpush1.msra.mxu0 0.0
    %565 = vmatprep.subr.mxu0 0.0
    %566 = vmatpush1.msra.mxu0 0.0
    %567 = vmatprep.subr.mxu0 0.0
    %568 = vmatpush1.msra.mxu0 0.0
    %569 = vmatprep.subr.mxu0 0.0
    %570 = vmatpush1.msra.mxu0 0.0
    %571 = vmatprep.subr.mxu0 0.0
    %572 = vmatpush1.msra.mxu0 0.0
    %573 = vmatprep.subr.mxu0 0.0
    %574 = vmatpush1.msra.mxu0 0.0
    %575 = vmatprep.mubr.f32.mxu0 0.0
    %576 = vmatmul.mubr.f32.gmra.mrb[0].mxu0 %v491
    %v577 = vpop.f32.mrb[0].mxu0
    %v578 = vadd.f32 0.0, %v577
    %v579 = vpop.f32.mrb[0].mxu0
    %580 = vmatprep.mubr.f32.mxu0 0.0
    %581 = vmatmul.mubr.f32.gmra.mrb[0].mxu0 %v492
    %v582 = vpop.f32.mrb[0].mxu0
    %v583 = vadd.f32 0.0, %v582
    %v584 = vpop.f32.mrb[0].mxu0
    %585 = vmatprep.mubr.f32.mxu0 0.0
    %586 = vmatmul.mubr.f32.gmra.mrb[0].mxu0 %v493
    %v587 = vpop.f32.mrb[0].mxu0
    %v588 = vadd.f32 0.0, %v587
    %v589 = vpop.f32.mrb[0].mxu0
    %590 = vmatprep.mubr.f32.mxu0 0.0
    %591 = vmatmul.mubr.f32.gmra.mrb[0].mxu0 %v494
    %v592 = vpop.f32.mrb[0].mxu0
    %v593 = vadd.f32 0.0, %v592
    %v594 = vpop.f32.mrb[0].mxu0
    %595 = vdwg.mxu0
    %596 = vmatprep.subr.mxu0 0.0
    %597 = vmatpush1.msra.mxu0 %v578
    %598 = vmatprep.subr.mxu0 0.0
    %599 = vmatpush1.msra.mxu0 %v583
    %600 = vmatprep.subr.mxu0 0.0
    %601 = vmatpush1.msra.mxu0 0.0
    %602 = vmatprep.subr.mxu0 0.0
    %603 = vmatpush1.msra.mxu0 0.0
    %604 = vmatprep.subr.mxu0 0.0
    %605 = vmatpush1.msra.mxu0 0.0
    %606 = vmatprep.subr.mxu0 0.0
    %607 = vmatpush1.msra.mxu0 0.0
    %608 = vmatprep.subr.mxu0 0.0
    %609 = vmatpush1.msra.mxu0 0.0
    %610 = vmatprep.subr.mxu0 0.0
    %611 = vmatpush1.msra.mxu0 0.0
    %612 = vmatprep.subr.mxu0 0.0
    %613 = vmatpush1.msra.mxu0 0.0
    %614 = vmatprep.subr.mxu0 0.0
    %615 = vmatpush1.msra.mxu0 0.0
    %616 = vmatprep.subr.mxu0 0.0
    %617 = vmatpush1.msra.mxu0 0.0
    %618 = vmatprep.subr.mxu0 0.0
    %619 = vmatpush1.msra.mxu0 0.0
    %620 = vmatprep.subr.mxu0 0.0
    %621 = vmatpush1.msra.mxu0 0.0
    %622 = vmatprep.subr.mxu0 0.0
    %623 = vmatpush1.msra.mxu0 0.0
    %624 = vmatprep.subr.mxu0 0.0
    %625 = vmatpush1.msra.mxu0 0.0
    %626 = vmatprep.subr.mxu0 0.0
    %627 = vmatpush1.msra.mxu0 0.0
    %628 = vmatprep.subr.mxu0 0.0
    %629 = vmatpush1.msra.mxu0 0.0
    %630 = vmatprep.subr.mxu0 0.0
    %631 = vmatpush1.msra.mxu0 0.0
    %632 = vmatprep.subr.mxu0 0.0
    %633 = vmatpush1.msra.mxu0 0.0
    %634 = vmatprep.subr.mxu0 0.0
    %635 = vmatpush1.msra.mxu0 0.0
    %636 = vmatprep.subr.mxu0 0.0
    %637 = vmatpush1.msra.mxu0 0.0
    %638 = vmatprep.subr.mxu0 0.0
    %639 = vmatpush1.msra.mxu0 0.0
    %640 = vmatprep.subr.mxu0 0.0
    %641 = vmatpush1.msra.mxu0 0.0
    %642 = vmatprep.subr.mxu0 0.0
    %643 = vmatpush1.msra.mxu0 0.0
    %644 = vmatprep.subr.mxu0 0.0
    %645 = vmatpush1.msra.mxu0 0.0
    %646 = vmatprep.subr.mxu0 0.0
    %647 = vmatpush1.msra.mxu0 0.0
    %648 = vmatprep.subr.mxu0 0.0
    %649 = vmatpush1.msra.mxu0 0.0
    %650 = vmatprep.subr.mxu0 0.0
    %651 = vmatpush1.msra.mxu0 0.0
    %652 = vmatprep.subr.mxu0 0.0
    %653 = vmatpush1.msra.mxu0 0.0
    %654 = vmatprep.subr.mxu0 0.0
    %655 = vmatpush1.msra.mxu0 0.0
    %656 = vmatprep.subr.mxu0 0.0
    %657 = vmatpush1.msra.mxu0 0.0
    %658 = vmatprep.subr.mxu0 0.0
    %659 = vmatpush1.msra.mxu0 0.0
    %660 = vmatprep.mubr.f32.mxu0 0.0
    %661 = vmatmul.mubr.f32.gmra.mrb[0].mxu0 %v264
    %v662 = vpop.f32.mrb[0].mxu0
    %v663 = vadd.f32 0.0, %v662
    %v664 = vpop.f32.mrb[0].mxu0
    %665 = vmatprep.mubr.f32.mxu0 0.0
    %666 = vmatmul.mubr.f32.gmra.mrb[0].mxu0 %v267
    %v667 = vpop.f32.mrb[0].mxu0
    %v668 = vadd.f32 0.0, %v667
    %v669 = vpop.f32.mrb[0].mxu0
    %670 = vdwg.mxu0
    %671 = vmatprep.subr.mxu0 0.0
    %672 = vmatpush1.msra.mxu0 %v588
    %673 = vmatprep.subr.mxu0 0.0
    %674 = vmatpush1.msra.mxu0 %v593
    %675 = vmatprep.subr.mxu0 0.0
    %676 = vmatpush1.msra.mxu0 0.0
    %677 = vmatprep.subr.mxu0 0.0
    %678 = vmatpush1.msra.mxu0 0.0
    %679 = vmatprep.subr.mxu0 0.0
    %680 = vmatpush1.msra.mxu0 0.0
    %681 = vmatprep.subr.mxu0 0.0
    %682 = vmatpush1.msra.mxu0 0.0
    %683 = vmatprep.subr.mxu0 0.0
    %684 = vmatpush1.msra.mxu0 0.0
    %685 = vmatprep.subr.mxu0 0.0
    %686 = vmatpush1.msra.mxu0 0.0
    %687 = vmatprep.subr.mxu0 0.0
    %688 = vmatpush1.msra.mxu0 0.0
    %689 = vmatprep.subr.mxu0 0.0
    %690 = vmatpush1.msra.mxu0 0.0
    %691 = vmatprep.subr.mxu0 0.0
    %692 = vmatpush1.msra.mxu0 0.0
    %693 = vmatprep.subr.mxu0 0.0
    %694 = vmatpush1.msra.mxu0 0.0
    %695 = vmatprep.subr.mxu0 0.0
    %696 = vmatpush1.msra.mxu0 0.0
    %697 = vmatprep.subr.mxu0 0.0
    %698 = vmatpush1.msra.mxu0 0.0
    %699 = vmatprep.subr.mxu0 0.0
    %700 = vmatpush1.msra.mxu0 0.0
    %701 = vmatprep.subr.mxu0 0.0
    %702 = vmatpush1.msra.mxu0 0.0
    %703 = vmatprep.subr.mxu0 0.0
    %704 = vmatpush1.msra.mxu0 0.0
    %705 = vmatprep.subr.mxu0 0.0
    %706 = vmatpush1.msra.mxu0 0.0
    %707 = vmatprep.subr.mxu0 0.0
    %708 = vmatpush1.msra.mxu0 0.0
    %709 = vmatprep.subr.mxu0 0.0
    %710 = vmatpush1.msra.mxu0 0.0
    %711 = vmatprep.subr.mxu0 0.0
    %712 = vmatpush1.msra.mxu0 0.0
    %713 = vmatprep.subr.mxu0 0.0
    %714 = vmatpush1.msra.mxu0 0.0
    %715 = vmatprep.subr.mxu0 0.0
    %716 = vmatpush1.msra.mxu0 0.0
    %717 = vmatprep.subr.mxu0 0.0
    %718 = vmatpush1.msra.mxu0 0.0
    %719 = vmatprep.subr.mxu0 0.0
    %720 = vmatpush1.msra.mxu0 0.0
    %721 = vmatprep.subr.mxu0 0.0
    %722 = vmatpush1.msra.mxu0 0.0
    %723 = vmatprep.subr.mxu0 0.0
    %724 = vmatpush1.msra.mxu0 0.0
    %725 = vmatprep.subr.mxu0 0.0
    %726 = vmatpush1.msra.mxu0 0.0
    %727 = vmatprep.subr.mxu0 0.0
    %728 = vmatpush1.msra.mxu0 0.0
    %729 = vmatprep.subr.mxu0 0.0
    %730 = vmatpush1.msra.mxu0 0.0
    %731 = vmatprep.subr.mxu0 0.0
    %732 = vmatpush1.msra.mxu0 0.0
    %733 = vmatprep.subr.mxu0 0.0
    %734 = vmatpush1.msra.mxu0 0.0
    %735 = vmatprep.mubr.f32.mxu0 0.0
    %736 = vmatmul.mubr.f32.gmra.mrb[0].mxu0 %v345
    %v737 = vpop.f32.mrb[0].mxu0
    %v738 = vadd.f32 0.0, %v737
    %v739 = vpop.f32.mrb[0].mxu0
    %740 = vmatprep.mubr.f32.mxu0 0.0
    %741 = vmatmul.mubr.f32.gmra.mrb[0].mxu0 %v348
    %v742 = vpop.f32.mrb[0].mxu0
    %v743 = vadd.f32 0.0, %v742
    %v744 = vpop.f32.mrb[0].mxu0
    %745 = vdwg.mxu0
    %v746 = vmul.f32 %v578, 0.75
    %v747 = vmul.f32 %v583, 0.75
    %v748 = vmul.f32 %v588, 0.75
    %v749 = vmul.f32 %v593, 0.75
    %v750 = vadd.f32 %v746, %v663
    %v751 = vadd.f32 %v747, %v668
    %v752 = vadd.f32 %v748, %v738
    %v753 = vadd.f32 %v749, %v743
    %v754 = vlaneseq
    %v755 = vshrl.u32 %v754, 7
    %v756 = vsub.s32 1, %v755
    %v757 = vrot.slane %v81, %v756
    %v758 = vadd.f32 %v750, %v757
    %v759 = vadd.f32 %v751, %v757
    %v760 = vadd.f32 %v752, %v757
    %v761 = vadd.f32 %v753, %v757
    %v762 = vmax.f32 %v758, 0.0
    %v763 = vmax.f32 %v759, 0.0
    %v764 = vmax.f32 %v760, 0.0
    %v765 = vmax.f32 %v761, 0.0
    %v766 = vadd.f32 %v762, %v763
    %v767 = vadd.f32 %v766, %v764
    %v768 = vadd.f32 %v767, %v765
    %v769 = vrot.slane %v768, 4
    %v770 = vadd.f32 %v768, %v769
    %v771 = vrot.slane %v770, 2
    %v772 = vadd.f32 %v770, %v771
    %v773 = vrot.slane %v772, 1
    %v774 = vadd.f32 %v772, %v773
    %v775 = vmul.f32 %v774, 0.03125
    %v776 = vmul.f32 %v762, %v762
    %v777 = vmul.f32 %v763, %v763
    %v778 = vmul.f32 %v764, %v764
    %v779 = vmul.f32 %v765, %v765
    %v780 = vadd.f32 %v776, %v777
    %v781 = vadd.f32 %v780, %v778
    %v782 = vadd.f32 %v781, %v779
    %v783 = vrot.slane %v782, 4
    %v784 = vadd.f32 %v782, %v783
    %v785 = vrot.slane %v784, 2
    %v786 = vadd.f32 %v784, %v785
    %v787 = vrot.slane %v786, 1
    %v788 = vadd.f32 %v786, %v787
    %v789 = vmul.f32 %v788, 0.03125
    %v790 = vmul.f32 %v775, %v775
    %v791 = vsub.f32 %v789, %v790
    %v792 = vadd.f32 %v791, 1e-05
    %v793 = vrsqrt.pop %v792
    %v794 = vmul.f32 %v81, %v793
    %v795 = vmul.f32 %v775, %v794
    %v797 = vrot.slane %v795, 5
    %v799 = vsub.f32 %v81, %v797
    %v800 = vlaneseq
    %v801 = vshrl.u32 %v800, 7
    %v802 = vsub.s32 4, %v801
    %v803 = vrot.slane %v794, %v802
    %v804 = vmul.f32 %v762, %v803
    %v805 = vmul.f32 %v763, %v803
    %v806 = vmul.f32 %v764, %v803
    %v807 = vmul.f32 %v765, %v803
    %v808 = vlaneseq
    %v809 = vshrl.u32 %v808, 7
    %v810 = vsub.s32 7, %v809
    %v811 = vrot.slane %v799, %v810
    %v812 = vadd.f32 %v804, %v811
    %v813 = vadd.f32 %v805, %v811
    %v814 = vadd.f32 %v806, %v811
    %v815 = vadd.f32 %v807, %v811
    %v816 = vld [vmem:[#allocation7 + $0x100] sm:$0xff]
    %v817 = vld [vmem:[#allocation7 + $0x108] sm:$0xff]
    %v818 = vld [vmem:[#allocation7 + $0x110] sm:$0xff]
    %v819 = vld [vmem:[#allocation7 + $0x118] sm:$0xff]
    %v820 = vld [vmem:[#allocation7 + $0x120] sm:$0xff]
    %v821 = vld [vmem:[#allocation7 + $0x128] sm:$0xff]
    %v822 = vld [vmem:[#allocation7 + $0x130] sm:$0xff]
    %v823 = vld [vmem:[#allocation7 + $0x138] sm:$0xff]
    %v824 = vld [vmem:[#allocation7 + $0x140] sm:$0xff]
    %v825 = vld [vmem:[#allocation7 + $0x148] sm:$0xff]
    %v826 = vld [vmem:[#allocation7 + $0x150] sm:$0xff]
    %v827 = vld [vmem:[#allocation7 + $0x158] sm:$0xff]
    %v828 = vld [vmem:[#allocation7 + $0x160] sm:$0xff]
    %v829 = vld [vmem:[#allocation7 + $0x168] sm:$0xff]
    %v830 = vld [vmem:[#allocation7 + $0x170] sm:$0xff]
    %v831 = vld [vmem:[#allocation7 + $0x178] sm:$0xff]
    %832 = vmatprep.subr.mxu0 0.0
    %833 = vmatpush1.msra.mxu0 %v816
    %834 = vmatprep.subr.mxu0 0.0
    %835 = vmatpush1.msra.mxu0 %v817
    %836 = vmatprep.subr.mxu0 0.0
    %837 = vmatpush1.msra.mxu0 %v818
    %838 = vmatprep.subr.mxu0 0.0
    %839 = vmatpush1.msra.mxu0 %v819
    %840 = vmatprep.subr.mxu0 0.0
    %841 = vmatpush1.msra.mxu0 %v820
    %842 = vmatprep.subr.mxu0 0.0
    %843 = vmatpush1.msra.mxu0 %v821
    %844 = vmatprep.subr.mxu0 0.0
    %845 = vmatpush1.msra.mxu0 %v822
    %846 = vmatprep.subr.mxu0 0.0
    %847 = vmatpush1.msra.mxu0 %v823
    %848 = vmatprep.subr.mxu0 0.0
    %849 = vmatpush1.msra.mxu0 %v824
    %850 = vmatprep.subr.mxu0 0.0
    %851 = vmatpush1.msra.mxu0 %v825
    %852 = vmatprep.subr.mxu0 0.0
    %853 = vmatpush1.msra.mxu0 %v826
    %854 = vmatprep.subr.mxu0 0.0
    %855 = vmatpush1.msra.mxu0 %v827
    %856 = vmatprep.subr.mxu0 0.0
    %857 = vmatpush1.msra.mxu0 %v828
    %858 = vmatprep.subr.mxu0 0.0
    %859 = vmatpush1.msra.mxu0 %v829
    %860 = vmatprep.subr.mxu0 0.0
    %861 = vmatpush1.msra.mxu0 %v830
    %862 = vmatprep.subr.mxu0 0.0
    %863 = vmatpush1.msra.mxu0 %v831
    %864 = vmatprep.subr.mxu0 0.0
    %865 = vmatpush1.msra.mxu0 0.0
    %866 = vmatprep.subr.mxu0 0.0
    %867 = vmatpush1.msra.mxu0 0.0
    %868 = vmatprep.subr.mxu0 0.0
    %869 = vmatpush1.msra.mxu0 0.0
    %870 = vmatprep.subr.mxu0 0.0
    %871 = vmatpush1.msra.mxu0 0.0
    %872 = vmatprep.subr.mxu0 0.0
    %873 = vmatpush1.msra.mxu0 0.0
    %874 = vmatprep.subr.mxu0 0.0
    %875 = vmatpush1.msra.mxu0 0.0
    %876 = vmatprep.subr.mxu0 0.0
    %877 = vmatpush1.msra.mxu0 0.0
    %878 = vmatprep.subr.mxu0 0.0
    %879 = vmatpush1.msra.mxu0 0.0
    %880 = vmatprep.subr.mxu0 0.0
    %881 = vmatpush1.msra.mxu0 0.0
    %882 = vmatprep.subr.mxu0 0.0
    %883 = vmatpush1.msra.mxu0 0.0
    %884 = vmatprep.subr.mxu0 0.0
    %885 = vmatpush1.msra.mxu0 0.0
    %886 = vmatprep.subr.mxu0 0.0
    %887 = vmatpush1.msra.mxu0 0.0
    %888 = vmatprep.subr.mxu0 0.0
    %889 = vmatpush1.msra.mxu0 0.0
    %890 = vmatprep.subr.mxu0 0.0
    %891 = vmatpush1.msra.mxu0 0.0
    %892 = vmatprep.subr.mxu0 0.0
    %893 = vmatpush1.msra.mxu0 0.0
    %894 = vmatprep.subr.mxu0 0.0
    %895 = vmatpush1.msra.mxu0 0.0
    %896 = vmatprep.mubr.f32.mxu0 0.0
    %897 = vmatmul.mubr.f32.gmra.mrb[0].mxu0 %v812
    %v898 = vpop.f32.mrb[0].mxu0
    %v899 = vadd.f32 0.0, %v898
    %v900 = vpop.f32.mrb[0].mxu0
    %901 = vmatprep.mubr.f32.mxu0 0.0
    %902 = vmatmul.mubr.f32.gmra.mrb[0].mxu0 %v813
    %v903 = vpop.f32.mrb[0].mxu0
    %v904 = vadd.f32 0.0, %v903
    %v905 = vpop.f32.mrb[0].mxu0
    %906 = vmatprep.mubr.f32.mxu0 0.0
    %907 = vmatmul.mubr.f32.gmra.mrb[0].mxu0 %v814
    %v908 = vpop.f32.mrb[0].mxu0
    %v909 = vadd.f32 0.0, %v908
    %v910 = vpop.f32.mrb[0].mxu0
    %911 = vmatprep.mubr.f32.mxu0 0.0
    %912 = vmatmul.mubr.f32.gmra.mrb[0].mxu0 %v815
    %v913 = vpop.f32.mrb[0].mxu0
    %v914 = vadd.f32 0.0, %v913
    %v915 = vpop.f32.mrb[0].mxu0
    %916 = vdwg.mxu0
    %917 = vmatprep.subr.mxu0 0.0
    %918 = vmatpush1.msra.mxu0 %v899
    %919 = vmatprep.subr.mxu0 0.0
    %920 = vmatpush1.msra.mxu0 %v904
    %921 = vmatprep.subr.mxu0 0.0
    %922 = vmatpush1.msra.mxu0 0.0
    %923 = vmatprep.subr.mxu0 0.0
    %924 = vmatpush1.msra.mxu0 0.0
    %925 = vmatprep.subr.mxu0 0.0
    %926 = vmatpush1.msra.mxu0 0.0
    %927 = vmatprep.subr.mxu0 0.0
    %928 = vmatpush1.msra.mxu0 0.0
    %929 = vmatprep.subr.mxu0 0.0
    %930 = vmatpush1.msra.mxu0 0.0
    %931 = vmatprep.subr.mxu0 0.0
    %932 = vmatpush1.msra.mxu0 0.0
    %933 = vmatprep.subr.mxu0 0.0
    %934 = vmatpush1.msra.mxu0 0.0
    %935 = vmatprep.subr.mxu0 0.0
    %936 = vmatpush1.msra.mxu0 0.0
    %937 = vmatprep.subr.mxu0 0.0
    %938 = vmatpush1.msra.mxu0 0.0
    %939 = vmatprep.subr.mxu0 0.0
    %940 = vmatpush1.msra.mxu0 0.0
    %941 = vmatprep.subr.mxu0 0.0
    %942 = vmatpush1.msra.mxu0 0.0
    %943 = vmatprep.subr.mxu0 0.0
    %944 = vmatpush1.msra.mxu0 0.0
    %945 = vmatprep.subr.mxu0 0.0
    %946 = vmatpush1.msra.mxu0 0.0
    %947 = vmatprep.subr.mxu0 0.0
    %948 = vmatpush1.msra.mxu0 0.0
    %949 = vmatprep.subr.mxu0 0.0
    %950 = vmatpush1.msra.mxu0 0.0
    %951 = vmatprep.subr.mxu0 0.0
    %952 = vmatpush1.msra.mxu0 0.0
    %953 = vmatprep.subr.mxu0 0.0
    %954 = vmatpush1.msra.mxu0 0.0
    %955 = vmatprep.subr.mxu0 0.0
    %956 = vmatpush1.msra.mxu0 0.0
    %957 = vmatprep.subr.mxu0 0.0
    %958 = vmatpush1.msra.mxu0 0.0
    %959 = vmatprep.subr.mxu0 0.0
    %960 = vmatpush1.msra.mxu0 0.0
    %961 = vmatprep.subr.mxu0 0.0
    %962 = vmatpush1.msra.mxu0 0.0
    %963 = vmatprep.subr.mxu0 0.0
    %964 = vmatpush1.msra.mxu0 0.0
    %965 = vmatprep.subr.mxu0 0.0
    %966 = vmatpush1.msra.mxu0 0.0
    %967 = vmatprep.subr.mxu0 0.0
    %968 = vmatpush1.msra.mxu0 0.0
    %969 = vmatprep.subr.mxu0 0.0
    %970 = vmatpush1.msra.mxu0 0.0
    %971 = vmatprep.subr.mxu0 0.0
    %972 = vmatpush1.msra.mxu0 0.0
    %973 = vmatprep.subr.mxu0 0.0
    %974 = vmatpush1.msra.mxu0 0.0
    %975 = vmatprep.subr.mxu0 0.0
    %976 = vmatpush1.msra.mxu0 0.0
    %977 = vmatprep.subr.mxu0 0.0
    %978 = vmatpush1.msra.mxu0 0.0
    %979 = vmatprep.subr.mxu0 0.0
    %980 = vmatpush1.msra.mxu0 0.0
    %981 = vmatprep.mubr.f32.mxu0 0.0
    %982 = vmatmul.mubr.f32.gmra.mrb[0].mxu0 %v264
    %v983 = vpop.f32.mrb[0].mxu0
    %v984 = vadd.f32 0.0, %v983
    %v985 = vpop.f32.mrb[0].mxu0
    %986 = vmatprep.mubr.f32.mxu0 0.0
    %987 = vmatmul.mubr.f32.gmra.mrb[0].mxu0 %v267
    %v988 = vpop.f32.mrb[0].mxu0
    %v989 = vadd.f32 0.0, %v988
    %v990 = vpop.f32.mrb[0].mxu0
    %991 = vdwg.mxu0
    %992 = vmatprep.subr.mxu0 0.0
    %993 = vmatpush1.msra.mxu0 %v909
    %994 = vmatprep.subr.mxu0 0.0
    %995 = vmatpush1.msra.mxu0 %v914
    %996 = vmatprep.subr.mxu0 0.0
    %997 = vmatpush1.msra.mxu0 0.0
    %998 = vmatprep.subr.mxu0 0.0
    %999 = vmatpush1.msra.mxu0 0.0
    %1000 = vmatprep.subr.mxu0 0.0
    %1001 = vmatpush1.msra.mxu0 0.0
    %1002 = vmatprep.subr.mxu0 0.0
    %1003 = vmatpush1.msra.mxu0 0.0
    %1004 = vmatprep.subr.mxu0 0.0
    %1005 = vmatpush1.msra.mxu0 0.0
    %1006 = vmatprep.subr.mxu0 0.0
    %1007 = vmatpush1.msra.mxu0 0.0
    %1008 = vmatprep.subr.mxu0 0.0
    %1009 = vmatpush1.msra.mxu0 0.0
    %1010 = vmatprep.subr.mxu0 0.0
    %1011 = vmatpush1.msra.mxu0 0.0
    %1012 = vmatprep.subr.mxu0 0.0
    %1013 = vmatpush1.msra.mxu0 0.0
    %1014 = vmatprep.subr.mxu0 0.0
    %1015 = vmatpush1.msra.mxu0 0.0
    %1016 = vmatprep.subr.mxu0 0.0
    %1017 = vmatpush1.msra.mxu0 0.0
    %1018 = vmatprep.subr.mxu0 0.0
    %1019 = vmatpush1.msra.mxu0 0.0
    %1020 = vmatprep.subr.mxu0 0.0
    %1021 = vmatpush1.msra.mxu0 0.0
    %1022 = vmatprep.subr.mxu0 0.0
    %1023 = vmatpush1.msra.mxu0 0.0
    %1024 = vmatprep.subr.mxu0 0.0
    %1025 = vmatpush1.msra.mxu0 0.0
    %1026 = vmatprep.subr.mxu0 0.0
    %1027 = vmatpush1.msra.mxu0 0.0
    %1028 = vmatprep.subr.mxu0 0.0
    %1029 = vmatpush1.msra.mxu0 0.0
    %1030 = vmatprep.subr.mxu0 0.0
    %1031 = vmatpush1.msra.mxu0 0.0
    %1032 = vmatprep.subr.mxu0 0.0
    %1033 = vmatpush1.msra.mxu0 0.0
    %1034 = vmatprep.subr.mxu0 0.0
    %1035 = vmatpush1.msra.mxu0 0.0
    %1036 = vmatprep.subr.mxu0 0.0
    %1037 = vmatpush1.msra.mxu0 0.0
    %1038 = vmatprep.subr.mxu0 0.0
    %1039 = vmatpush1.msra.mxu0 0.0
    %1040 = vmatprep.subr.mxu0 0.0
    %1041 = vmatpush1.msra.mxu0 0.0
    %1042 = vmatprep.subr.mxu0 0.0
    %1043 = vmatpush1.msra.mxu0 0.0
    %1044 = vmatprep.subr.mxu0 0.0
    %1045 = vmatpush1.msra.mxu0 0.0
    %1046 = vmatprep.subr.mxu0 0.0
    %1047 = vmatpush1.msra.mxu0 0.0
    %1048 = vmatprep.subr.mxu0 0.0
    %1049 = vmatpush1.msra.mxu0 0.0
    %1050 = vmatprep.subr.mxu0 0.0
    %1051 = vmatpush1.msra.mxu0 0.0
    %1052 = vmatprep.subr.mxu0 0.0
    %1053 = vmatpush1.msra.mxu0 0.0
    %1054 = vmatprep.subr.mxu0 0.0
    %1055 = vmatpush1.msra.mxu0 0.0
    %1056 = vmatprep.mubr.f32.mxu0 0.0
    %1057 = vmatmul.mubr.f32.gmra.mrb[0].mxu0 %v345
    %v1058 = vpop.f32.mrb[0].mxu0
    %v1059 = vadd.f32 0.0, %v1058
    %v1060 = vpop.f32.mrb[0].mxu0
    %1061 = vmatprep.mubr.f32.mxu0 0.0
    %1062 = vmatmul.mubr.f32.gmra.mrb[0].mxu0 %v348
    %v1063 = vpop.f32.mrb[0].mxu0
    %v1064 = vadd.f32 0.0, %v1063
    %v1065 = vpop.f32.mrb[0].mxu0
    %1066 = vdwg.mxu0
    %v1067 = vmul.f32 %v899, 0.75
    %v1068 = vmul.f32 %v904, 0.75
    %v1069 = vmul.f32 %v909, 0.75
    %v1070 = vmul.f32 %v914, 0.75
    %v1071 = vadd.f32 %v1067, %v984
    %v1072 = vadd.f32 %v1068, %v989
    %v1073 = vadd.f32 %v1069, %v1059
    %v1074 = vadd.f32 %v1070, %v1064
    %v1075 = vlaneseq
    %v1076 = vshrl.u32 %v1075, 7
    %v1077 = vsub.s32 2, %v1076
    %v1078 = vrot.slane %v81, %v1077
    %v1079 = vadd.f32 %v1071, %v1078
    %v1080 = vadd.f32 %v1072, %v1078
    %v1081 = vadd.f32 %v1073, %v1078
    %v1082 = vadd.f32 %v1074, %v1078
    %v1083 = vmax.f32 %v1079, 0.0
    %v1084 = vmax.f32 %v1080, 0.0
    %v1085 = vmax.f32 %v1081, 0.0
    %v1086 = vmax.f32 %v1082, 0.0
    %v1087 = vadd.f32 %v1083, %v1084
    %v1088 = vadd.f32 %v1087, %v1085
    %v1089 = vadd.f32 %v1088, %v1086
    %v1090 = vrot.slane %v1089, 4
    %v1091 = vadd.f32 %v1089, %v1090
    %v1092 = vrot.slane %v1091, 2
    %v1093 = vadd.f32 %v1091, %v1092
    %v1094 = vrot.slane %v1093, 1
    %v1095 = vadd.f32 %v1093, %v1094
    %v1096 = vmul.f32 %v1095, 0.03125
    %v1097 = vmul.f32 %v1083, %v1083
    %v1098 = vmul.f32 %v1084, %v1084
    %v1099 = vmul.f32 %v1085, %v1085
    %v1100 = vmul.f32 %v1086, %v1086
    %v1101 = vadd.f32 %v1097, %v1098
    %v1102 = vadd.f32 %v1101, %v1099
    %v1103 = vadd.f32 %v1102, %v1100
    %v1104 = vrot.slane %v1103, 4
    %v1105 = vadd.f32 %v1103, %v1104
    %v1106 = vrot.slane %v1105, 2
    %v1107 = vadd.f32 %v1105, %v1106
    %v1108 = vrot.slane %v1107, 1
    %v1109 = vadd.f32 %v1107, %v1108
    %v1110 = vmul.f32 %v1109, 0.03125
    %v1111 = vmul.f32 %v1096, %v1096
    %v1112 = vsub.f32 %v1110, %v1111
    %v1113 = vadd.f32 %v1112, 1e-05
    %v1114 = vrsqrt.pop %v1113
    %v1115 = vmul.f32 %v81, %v1114
    %v1116 = vmul.f32 %v1096, %v1115
    %v1118 = vrot.slane %v1116, 5
    %v1120 = vsub.f32 %v82, %v1118
    %v1121 = vlaneseq
    %v1122 = vshrl.u32 %v1121, 7
    %v1123 = vsub.s32 5, %v1122
    %v1124 = vrot.slane %v1115, %v1123
    %v1125 = vmul.f32 %v1083, %v1124
    %v1126 = vmul.f32 %v1084, %v1124
    %v1127 = vmul.f32 %v1085, %v1124
    %v1128 = vmul.f32 %v1086, %v1124
    %v1129 = vlaneseq
    %v1130 = vshrl.u32 %v1129, 7
    %v1131 = vsub.s32 0, %v1130
    %v1132 = vrot.slane %v1120, %v1131
    %v1133 = vadd.f32 %v1125, %v1132
    %v1134 = vadd.f32 %v1126, %v1132
    %v1135 = vadd.f32 %v1127, %v1132
    %v1136 = vadd.f32 %v1128, %v1132
    %v1137 = vld [vmem:[#allocation7 + $0x180] sm:$0xff]
    %v1138 = vld [vmem:[#allocation7 + $0x188] sm:$0xff]
    %v1139 = vld [vmem:[#allocation7 + $0x190] sm:$0xff]
    %v1140 = vld [vmem:[#allocation7 + $0x198] sm:$0xff]
    %v1141 = vld [vmem:[#allocation7 + $0x1a0] sm:$0xff]
    %v1142 = vld [vmem:[#allocation7 + $0x1a8] sm:$0xff]
    %v1143 = vld [vmem:[#allocation7 + $0x1b0] sm:$0xff]
    %v1144 = vld [vmem:[#allocation7 + $0x1b8] sm:$0xff]
    %v1145 = vld [vmem:[#allocation7 + $0x1c0] sm:$0xff]
    %v1146 = vld [vmem:[#allocation7 + $0x1c8] sm:$0xff]
    %v1147 = vld [vmem:[#allocation7 + $0x1d0] sm:$0xff]
    %v1148 = vld [vmem:[#allocation7 + $0x1d8] sm:$0xff]
    %v1149 = vld [vmem:[#allocation7 + $0x1e0] sm:$0xff]
    %v1150 = vld [vmem:[#allocation7 + $0x1e8] sm:$0xff]
    %v1151 = vld [vmem:[#allocation7 + $0x1f0] sm:$0xff]
    %v1152 = vld [vmem:[#allocation7 + $0x1f8] sm:$0xff]
    %v1153 = vld [vmem:[#allocation7 + $0x200] sm:$0xff]
    %v1154 = vld [vmem:[#allocation7 + $0x208] sm:$0xff]
    %v1155 = vld [vmem:[#allocation7 + $0x210] sm:$0xff]
    %v1156 = vld [vmem:[#allocation7 + $0x218] sm:$0xff]
    %v1157 = vld [vmem:[#allocation7 + $0x220] sm:$0xff]
    %v1158 = vld [vmem:[#allocation7 + $0x228] sm:$0xff]
    %v1159 = vld [vmem:[#allocation7 + $0x230] sm:$0xff]
    %v1160 = vld [vmem:[#allocation7 + $0x238] sm:$0xff]
    %v1161 = vld [vmem:[#allocation7 + $0x240] sm:$0xff]
    %v1162 = vld [vmem:[#allocation7 + $0x248] sm:$0xff]
    %v1163 = vld [vmem:[#allocation7 + $0x250] sm:$0xff]
    %v1164 = vld [vmem:[#allocation7 + $0x258] sm:$0xff]
    %v1165 = vld [vmem:[#allocation7 + $0x260] sm:$0xff]
    %v1166 = vld [vmem:[#allocation7 + $0x268] sm:$0xff]
    %v1167 = vld [vmem:[#allocation7 + $0x270] sm:$0xff]
    %v1168 = vld [vmem:[#allocation7 + $0x278] sm:$0xff]
    %v1169 = vld [vmem:[#allocation7 + $0x280] sm:$0xff]
    %v1170 = vld [vmem:[#allocation7 + $0x288] sm:$0xff]
    %v1171 = vld [vmem:[#allocation7 + $0x290] sm:$0xff]
    %v1172 = vld [vmem:[#allocation7 + $0x298] sm:$0xff]
    %v1173 = vld [vmem:[#allocation7 + $0x2a0] sm:$0xff]
    %v1174 = vld [vmem:[#allocation7 + $0x2a8] sm:$0xff]
    %v1175 = vld [vmem:[#allocation7 + $0x2b0] sm:$0xff]
    %v1176 = vld [vmem:[#allocation7 + $0x2b8] sm:$0xff]
    %v1177 = vld [vmem:[#allocation7 + $0x2c0] sm:$0xff]
    %v1178 = vld [vmem:[#allocation7 + $0x2c8] sm:$0xff]
    %v1179 = vld [vmem:[#allocation7 + $0x2d0] sm:$0xff]
    %v1180 = vld [vmem:[#allocation7 + $0x2d8] sm:$0xff]
    %v1181 = vld [vmem:[#allocation7 + $0x2e0] sm:$0xff]
    %v1182 = vld [vmem:[#allocation7 + $0x2e8] sm:$0xff]
    %v1183 = vld [vmem:[#allocation7 + $0x2f0] sm:$0xff]
    %v1184 = vld [vmem:[#allocation7 + $0x2f8] sm:$0xff]
    %v1185 = vlaneseq
    %v1186 = vshrl.u32 %v1185, 7
    %v1187 = vsub.s32 1, %v1186
    %v1188 = vrot.slane %v82, %v1187
    %1189 = vmatprep.subr.mxu0 0.0
    %1190 = vmatpush1.msra.mxu0 %v1137
    %1191 = vmatprep.subr.mxu0 0.0
    %1192 = vmatpush1.msra.mxu0 %v1138
    %1193 = vmatprep.subr.mxu0 0.0
    %1194 = vmatpush1.msra.mxu0 %v1139
    %1195 = vmatprep.subr.mxu0 0.0
    %1196 = vmatpush1.msra.mxu0 %v1140
    %1197 = vmatprep.subr.mxu0 0.0
    %1198 = vmatpush1.msra.mxu0 %v1141
    %1199 = vmatprep.subr.mxu0 0.0
    %1200 = vmatpush1.msra.mxu0 %v1142
    %1201 = vmatprep.subr.mxu0 0.0
    %1202 = vmatpush1.msra.mxu0 %v1143
    %1203 = vmatprep.subr.mxu0 0.0
    %1204 = vmatpush1.msra.mxu0 %v1144
    %1205 = vmatprep.subr.mxu0 0.0
    %1206 = vmatpush1.msra.mxu0 %v1145
    %1207 = vmatprep.subr.mxu0 0.0
    %1208 = vmatpush1.msra.mxu0 %v1146
    %1209 = vmatprep.subr.mxu0 0.0
    %1210 = vmatpush1.msra.mxu0 %v1147
    %1211 = vmatprep.subr.mxu0 0.0
    %1212 = vmatpush1.msra.mxu0 %v1148
    %1213 = vmatprep.subr.mxu0 0.0
    %1214 = vmatpush1.msra.mxu0 %v1149
    %1215 = vmatprep.subr.mxu0 0.0
    %1216 = vmatpush1.msra.mxu0 %v1150
    %1217 = vmatprep.subr.mxu0 0.0
    %1218 = vmatpush1.msra.mxu0 %v1151
    %1219 = vmatprep.subr.mxu0 0.0
    %1220 = vmatpush1.msra.mxu0 %v1152
    %1221 = vmatprep.subr.mxu0 0.0
    %1222 = vmatpush1.msra.mxu0 %v1153
    %1223 = vmatprep.subr.mxu0 0.0
    %1224 = vmatpush1.msra.mxu0 %v1154
    %1225 = vmatprep.subr.mxu0 0.0
    %1226 = vmatpush1.msra.mxu0 %v1155
    %1227 = vmatprep.subr.mxu0 0.0
    %1228 = vmatpush1.msra.mxu0 %v1156
    %1229 = vmatprep.subr.mxu0 0.0
    %1230 = vmatpush1.msra.mxu0 %v1157
    %1231 = vmatprep.subr.mxu0 0.0
    %1232 = vmatpush1.msra.mxu0 %v1158
    %1233 = vmatprep.subr.mxu0 0.0
    %1234 = vmatpush1.msra.mxu0 %v1159
    %1235 = vmatprep.subr.mxu0 0.0
    %1236 = vmatpush1.msra.mxu0 %v1160
    %1237 = vmatprep.subr.mxu0 0.0
    %1238 = vmatpush1.msra.mxu0 %v1161
    %1239 = vmatprep.subr.mxu0 0.0
    %1240 = vmatpush1.msra.mxu0 %v1162
    %1241 = vmatprep.subr.mxu0 0.0
    %1242 = vmatpush1.msra.mxu0 %v1163
    %1243 = vmatprep.subr.mxu0 0.0
    %1244 = vmatpush1.msra.mxu0 %v1164
    %1245 = vmatprep.subr.mxu0 0.0
    %1246 = vmatpush1.msra.mxu0 %v1165
    %1247 = vmatprep.subr.mxu0 0.0
    %1248 = vmatpush1.msra.mxu0 %v1166
    %1249 = vmatprep.subr.mxu0 0.0
    %1250 = vmatpush1.msra.mxu0 %v1167
    %1251 = vmatprep.subr.mxu0 0.0
    %1252 = vmatpush1.msra.mxu0 %v1168
    %1253 = vmatprep.mubr.f32.mxu0 %v812
    %1254 = vmatmul.mubr.f32.gmra.mrb[0].mxu0 %v491
    %v1255 = vpop.f32.mrb[0].mxu0
    %v1256 = vadd.f32 %v1188, %v1255
    %v1257 = vpop.f32.mrb[0].mxu0
    %1258 = vmatprep.mubr.f32.mxu0 %v813
    %1259 = vmatmul.mubr.f32.gmra.mrb[0].mxu0 %v492
    %v1260 = vpop.f32.mrb[0].mxu0
    %v1261 = vadd.f32 %v1188, %v1260
    %v1262 = vpop.f32.mrb[0].mxu0
    %1263 = vmatprep.mubr.f32.mxu0 %v814
    %1264 = vmatmul.mubr.f32.gmra.mrb[0].mxu0 %v493
    %v1265 = vpop.f32.mrb[0].mxu0
    %v1266 = vadd.f32 %v1188, %v1265
    %v1267 = vpop.f32.mrb[0].mxu0
    %1268 = vmatprep.mubr.f32.mxu0 %v815
    %1269 = vmatmul.mubr.f32.gmra.mrb[0].mxu0 %v494
    %v1270 = vpop.f32.mrb[0].mxu0
    %v1271 = vadd.f32 %v1188, %v1270
    %v1272 = vpop.f32.mrb[0].mxu0
    %1273 = vdwg.mxu0
    %1274 = vmatprep.subr.mxu0 0.0
    %1275 = vmatpush1.msra.mxu0 %v1169
    %1276 = vmatprep.subr.mxu0 0.0
    %1277 = vmatpush1.msra.mxu0 %v1170
    %1278 = vmatprep.subr.mxu0 0.0
    %1279 = vmatpush1.msra.mxu0 %v1171
    %1280 = vmatprep.subr.mxu0 0.0
    %1281 = vmatpush1.msra.mxu0 %v1172
    %1282 = vmatprep.subr.mxu0 0.0
    %1283 = vmatpush1.msra.mxu0 %v1173
    %1284 = vmatprep.subr.mxu0 0.0
    %1285 = vmatpush1.msra.mxu0 %v1174
    %1286 = vmatprep.subr.mxu0 0.0
    %1287 = vmatpush1.msra.mxu0 %v1175
    %1288 = vmatprep.subr.mxu0 0.0
    %1289 = vmatpush1.msra.mxu0 %v1176
    %1290 = vmatprep.subr.mxu0 0.0
    %1291 = vmatpush1.msra.mxu0 %v1177
    %1292 = vmatprep.subr.mxu0 0.0
    %1293 = vmatpush1.msra.mxu0 %v1178
    %1294 = vmatprep.subr.mxu0 0.0
    %1295 = vmatpush1.msra.mxu0 %v1179
    %1296 = vmatprep.subr.mxu0 0.0
    %1297 = vmatpush1.msra.mxu0 %v1180
    %1298 = vmatprep.subr.mxu0 0.0
    %1299 = vmatpush1.msra.mxu0 %v1181
    %1300 = vmatprep.subr.mxu0 0.0
    %1301 = vmatpush1.msra.mxu0 %v1182
    %1302 = vmatprep.subr.mxu0 0.0
    %1303 = vmatpush1.msra.mxu0 %v1183
    %1304 = vmatprep.subr.mxu0 0.0
    %1305 = vmatpush1.msra.mxu0 %v1184
    %1306 = vmatprep.subr.mxu0 0.0
    %1307 = vmatpush1.msra.mxu0 0.0
    %1308 = vmatprep.subr.mxu0 0.0
    %1309 = vmatpush1.msra.mxu0 0.0
    %1310 = vmatprep.subr.mxu0 0.0
    %1311 = vmatpush1.msra.mxu0 0.0
    %1312 = vmatprep.subr.mxu0 0.0
    %1313 = vmatpush1.msra.mxu0 0.0
    %1314 = vmatprep.subr.mxu0 0.0
    %1315 = vmatpush1.msra.mxu0 0.0
    %1316 = vmatprep.subr.mxu0 0.0
    %1317 = vmatpush1.msra.mxu0 0.0
    %1318 = vmatprep.subr.mxu0 0.0
    %1319 = vmatpush1.msra.mxu0 0.0
    %1320 = vmatprep.subr.mxu0 0.0
    %1321 = vmatpush1.msra.mxu0 0.0
    %1322 = vmatprep.subr.mxu0 0.0
    %1323 = vmatpush1.msra.mxu0 0.0
    %1324 = vmatprep.subr.mxu0 0.0
    %1325 = vmatpush1.msra.mxu0 0.0
    %1326 = vmatprep.subr.mxu0 0.0
    %1327 = vmatpush1.msra.mxu0 0.0
    %1328 = vmatprep.subr.mxu0 0.0
    %1329 = vmatpush1.msra.mxu0 0.0
    %1330 = vmatprep.subr.mxu0 0.0
    %1331 = vmatpush1.msra.mxu0 0.0
    %1332 = vmatprep.subr.mxu0 0.0
    %1333 = vmatpush1.msra.mxu0 0.0
    %1334 = vmatprep.subr.mxu0 0.0
    %1335 = vmatpush1.msra.mxu0 0.0
    %1336 = vmatprep.subr.mxu0 0.0
    %1337 = vmatpush1.msra.mxu0 0.0
    %1338 = vmatprep.mubr.f32.mxu0 0.0
    %1339 = vmatmul.mubr.f32.gmra.mrb[0].mxu0 %v1133
    %v1340 = vpop.f32.mrb[0].mxu0
    %v1341 = vadd.f32 %v1256, %v1340
    %v1342 = vpop.f32.mrb[0].mxu0
    %1343 = vmatprep.mubr.f32.mxu0 0.0
    %1344 = vmatmul.mubr.f32.gmra.mrb[0].mxu0 %v1134
    %v1345 = vpop.f32.mrb[0].mxu0
    %v1346 = vadd.f32 %v1261, %v1345
    %v1347 = vpop.f32.mrb[0].mxu0
    %1348 = vmatprep.mubr.f32.mxu0 0.0
    %1349 = vmatmul.mubr.f32.gmra.mrb[0].mxu0 %v1135
    %v1350 = vpop.f32.mrb[0].mxu0
    %v1351 = vadd.f32 %v1266, %v1350
    %v1352 = vpop.f32.mrb[0].mxu0
    %1353 = vmatprep.mubr.f32.mxu0 0.0
    %1354 = vmatmul.mubr.f32.gmra.mrb[0].mxu0 %v1136
    %v1355 = vpop.f32.mrb[0].mxu0
    %v1356 = vadd.f32 %v1271, %v1355
    %v1357 = vpop.f32.mrb[0].mxu0
    %1358 = vdwg.mxu0
    %v1359 = vmax.f32 %v1341, 0.0
    %v1360 = vmax.f32 %v1346, 0.0
    %v1361 = vmax.f32 %v1351, 0.0
    %v1362 = vmax.f32 %v1356, 0.0
    %1363 = vst [vmem:[#allocation10] sm:$0xff] %v1359
    %1364 = vst [vmem:[#allocation10 + $0x8] sm:$0xff] %v1360
    %1365 = vst [vmem:[#allocation10 + $0x10] sm:$0xff] %v1361
    %1366 = vst [vmem:[#allocation10 + $0x18] sm:$0xff] %v1362
    // Predicated region
    $region34: #{tpu_custom_call.1} parent=1 // pred_check
      _
    $region35: #{tpu_custom_call.1} parent=1 // pred_check_branch
      %1368 = sbr.rel (0) target = $region37
    $region36: #{tpu_custom_call.1} parent=1 // pred_region
      %s1370 = ssub.s32 512, 512
      %1371 = vsyncadd [#allocation4], %s1370
      %s1372 = sshll.u32 [#allocation10], 4
      %s1373 = int_to_ptr.vmem [resolvable:$true] %s1372
      %1378 = dma.vmem_to_hbm [thread:$0]  %s1373, 512, %s4, [#allocation4], 128, 128, 8
    $region37: #{tpu_custom_call.1} parent=1 // pred_fallthru
      _
    // Predicated region
    $region38: #{tpu_custom_call.1} parent=1 // pred_check
      _
    $region39: #{tpu_custom_call.1} parent=1 // pred_check_branch
      %1380 = sbr.rel (0) target = $region41
    $region40: #{tpu_custom_call.1} parent=1 // pred_region
      %1381 = dma.done [#allocation4], 512
    $region41: #{tpu_custom_call.1} parent=1 // pred_fallthru
      _
    %1382 = vsyncpa [#allocation3], 1
    %1383 = vsyncpa [#allocation6], 1
    %1384 = vsyncpa [#allocation9], 1
    %1385 = vsyncpa [#allocation4], 1

</llo_original>
